<compile_context>
chip_gen: v7x
topology: tpu7x:2x2x1
jax: 0.10.0
libtpu: 0.0.40
codegen_flags: <defaults>
</compile_context>

<pallas_src>
import math
from functools import partial

import jax
import jax.numpy as jnp
import numpy as np
from jax.experimental import pallas as pl
from jax.experimental.pallas import tpu as pltpu

_EPS = 1e-6
_SQRT_HALF = 1.0 / math.sqrt(2.0)

# Set to jnp.bfloat16 on v6e/v7x for ~2x MXU throughput on the 1x1 convs
# (accumulation stays f32 via preferred_element_type).  f32 keeps the
# self-test inside the 1e-4 tolerance against the f32 reference.
_MATMUL_DTYPE = jnp.float32


# ---------------------------------------------------------------------------
# in-kernel helpers (traced inside the Pallas kernel body)
# ---------------------------------------------------------------------------
def _layernorm(v):
    # LayerNorm over channels (axis 0 in (C, N) layout); biased variance,
    # torch eps semantics: (var + eps).sqrt().  rsqrt -> EUP, no VALU divide.
    mu = jnp.mean(v, axis=0, keepdims=True)
    d = v - mu
    var = jnp.mean(d * d, axis=0, keepdims=True)
    return d * jax.lax.rsqrt(var + _EPS)


def _erf(x):
    # Abramowitz & Stegun 7.1.26 rational approximation (|err| <= 1.5e-7),
    # built only from ops with guaranteed Mosaic lowerings.
    p = 0.3275911
    a1, a2, a3, a4, a5 = (0.254829592, -0.284496736, 1.421413741,
                          -1.453152027, 1.061405429)
    sign = jnp.where(x >= 0.0, 1.0, -1.0)
    ax = jnp.abs(x)
    # exact reciprocal keeps us well inside the 1e-4 test tolerance; switch to
    # approx=True (EUP) when a looser tolerance is acceptable.
    t = pl.reciprocal(1.0 + p * ax, approx=False)
    poly = ((((a5 * t + a4) * t + a3) * t + a2) * t + a1) * t
    return sign * (1.0 - poly * jnp.exp(-ax * ax))


def _gelu_exact(x):
    # matches torch.nn.GELU() (erf form)
    return 0.5 * x * (1.0 + _erf(x * _SQRT_HALF))


def _pointwise(v, w, b):
    # 1x1 conv in (C, N) layout: (Cout, Cin) @ (Cin, N) on the MXU.
    y = jnp.dot(w.astype(_MATMUL_DTYPE), v.astype(_MATMUL_DTYPE),
                preferred_element_type=jnp.float32)
    return y + b


def _dwconv3x3(v, w9_ref, b, masks, H, W):
    # Depthwise 3x3, stride 1, zero padding 1, on (C, N) with N = H*W
    # (row-major spatial flattening).  w9_ref: (9, C, 1) VMEM ref with tap
    # t = kh*3 + kw.  b: (C, 1).  masks[(dh, dw)]: (1, N) f32 boundary masks.
    # Taps are built with pltpu.roll along the lane axis (XLU) + masks:
    # no concatenates, no padded copies, no misaligned slices.
    N = H * W
    out = v * w9_ref[4] + b                       # centre tap + bias as init
    for kh in range(3):
        for kw in range(3):
            dh, dw = kh - 1, kw - 1
            if dh == 0 and dw == 0:
                continue
            # want tap[k] = v[k + dh*W + dw]   (jnp.roll semantics)
            shift = (-(dh * W + dw)) % N
            tap = pltpu.roll(v, shift=shift, axis=1)
            out = out + (tap * masks[(dh, dw)]) * w9_ref[kh * 3 + kw]
    return out


# ---------------------------------------------------------------------------
# Pallas kernel: one batch element per grid step, everything fused in VMEM.
# ---------------------------------------------------------------------------
def _swin_block_kernel(x_ref, pos_ref,
                       ln1_w_ref, ln1_b_ref,
                       attn_w_ref, attn_b_ref,
                       fc1_w_ref, fc1_b_ref,
                       dw_w_ref, dw_b_ref,
                       fc2_w_ref, fc2_b_ref,
                       o_ref, *, H, W):
    x = x_ref[0].astype(jnp.float32)              # (C, N)
    row = pos_ref[0:1, :]                         # (1, N) int32 spatial row
    col = pos_ref[1:2, :]                         # (1, N) int32 spatial col

    # boundary-validity masks, shared by both depthwise convs
    f32 = jnp.float32
    row_m = {-1: (row >= 1).astype(f32), 0: None, 1: (row <= H - 2).astype(f32)}
    col_m = {-1: (col >= 1).astype(f32), 0: None, 1: (col <= W - 2).astype(f32)}
    masks = {}
    for dh in (-1, 0, 1):
        for dw in (-1, 0, 1):
            if dh == 0 and dw == 0:
                continue
            rm, cm = row_m[dh], col_m[dw]
            masks[(dh, dw)] = rm if cm is None else (cm if rm is None else rm * cm)

    # --- x = x + attn(norm1(x)) ---
    h = _layernorm(x) * ln1_w_ref[...] + ln1_b_ref[...]
    x = x + _dwconv3x3(h, attn_w_ref, attn_b_ref[...], masks, H, W)

    # --- x = x + mlp(norm2(x))    (norm2's gamma/beta pre-folded into fc1) ---
    h = _layernorm(x)
    h = _pointwise(h, fc1_w_ref[...], fc1_b_ref[...])     # fc1 (1x1 conv)
    h = _dwconv3x3(h, dw_w_ref, dw_b_ref[...], masks, H, W)
    h = _gelu_exact(h)                                    # exact (erf) GELU
    h = _pointwise(h, fc2_w_ref[...], fc2_b_ref[...])     # fc2 (1x1 conv)

    o_ref[0] = (x + h).astype(o_ref.dtype)


# ---------------------------------------------------------------------------
# wrapper
# ---------------------------------------------------------------------------
@jax.jit
def swin_block(x_nchw, kparams):
    """x_nchw: (B, C, H, W) float32.  kparams: tuple from to_kernel_params()."""
    B, C, H, W = x_nchw.shape
    N = H * W
    Ch = kparams[4].shape[0]                      # mlp hidden width (= C here)

    x = x_nchw.reshape(B, C, N)                   # free reshape, NO transpose

    # spatial coordinates computed outside the kernel (no in-kernel int div)
    k = jnp.arange(N, dtype=jnp.int32)
    pos = jnp.stack([k // W, k % W], axis=0)      # (2, N) int32

    def const_spec(shape):
        return pl.BlockSpec(shape, lambda b, _n=len(shape): (0,) * _n)

    in_specs = ([pl.BlockSpec((1, C, N), lambda b: (b, 0, 0)),
                 const_spec(pos.shape)]
                + [const_spec(p.shape) for p in kparams])

    param_bytes = sum(int(p.size) * p.dtype.itemsize for p in kparams)
    cost = pl.CostEstimate(
        flops=int(B * N * (4 * C * Ch + 20 * (C + Ch))),
        transcendentals=int(B * N * (Ch + 2)),
        bytes_accessed=int(8 * B * C * N + param_bytes + 8 * N),
    )

    out = pl.pallas_call(
        partial(_swin_block_kernel, H=H, W=W),
        out_shape=jax.ShapeDtypeStruct((B, C, N), x.dtype),
        grid_spec=pltpu.PrefetchScalarGridSpec(
            num_scalar_prefetch=0,
            grid=(B,),
            in_specs=in_specs,
            out_specs=pl.BlockSpec((1, C, N), lambda b: (b, 0, 0)),
        ),
        compiler_params=pltpu.CompilerParams(
            dimension_semantics=("parallel",),
            vmem_limit_bytes=48 * 1024 * 1024,
        ),
        cost_estimate=cost,
        # residual block: the output may reuse x's HBM buffer (copy-free when
        # the caller donates x).
        input_output_aliases={0: 0},
    )(x, pos, *kparams)

    # TODO(synk): for very large H*W on v7x (64 MiB VMEM) add a second grid
    # axis tiling N with a +/-W halo instead of one whole image per step.
    return out.reshape(B, C, H, W)


# ---------------------------------------------------------------------------
# deterministic parameter construction (PyTorch-shaped) + conversion to the
# layouts the kernel consumes (including the LN2 -> fc1 fold).
# ---------------------------------------------------------------------------
def init_torch_params(key, C):
    ks = jax.random.split(key, 12)
    f32 = jnp.float32

    def n(k, shape, s=0.1):
        return s * jax.random.normal(k, shape, f32)

    return {
        "ln1_w": 1.0 + n(ks[0], (C,)),            # non-trivial affines so the
        "ln1_b": n(ks[1], (C,)),                  # LN folding is actually tested
        "attn_w": n(ks[2], (C, 1, 3, 3)),         # depthwise 3x3
        "attn_b": n(ks[3], (C,)),
        "ln2_w": 1.0 + n(ks[4], (C,)),
        "ln2_b": n(ks[5], (C,)),
        "fc1_w": n(ks[6], (C, C, 1, 1)),          # 1x1 conv
        "fc1_b": n(ks[7], (C,)),
        "dw_w": n(ks[8], (C, 1, 3, 3)),           # depthwise 3x3
        "dw_b": n(ks[9], (C,)),
        "fc2_w": n(ks[10], (C, C, 1, 1)),         # 1x1 conv
        "fc2_b": n(ks[11], (C,)),
    }


def to_kernel_params(tp):
    def dw9(w):     # (C, 1, 3, 3) -> (9, C, 1), tap t = kh*3 + kw
        c = w.shape[0]
        return jnp.transpose(w[:, 0].reshape(c, 9), (1, 0)).reshape(9, c, 1)

    def colv(v):    # (C,) -> (C, 1)
        return v.reshape(-1, 1)

    w1 = tp["fc1_w"][:, :, 0, 0]                  # (Ch, C)
    # fold LayerNorm2's affine into fc1:  fc1(g*xn + b) = (W*g) xn + (W b + bias)
    w1_folded = w1 * tp["ln2_w"][None, :]
    b1_folded = tp["fc1_b"] + w1 @ tp["ln2_b"]
    w2 = tp["fc2_w"][:, :, 0, 0]                  # (C, Ch)

    return (colv(tp["ln1_w"]), colv(tp["ln1_b"]),
            dw9(tp["attn_w"]), colv(tp["attn_b"]),
            w1_folded, colv(b1_folded),
            dw9(tp["dw_w"]), colv(tp["dw_b"]),
            w2, colv(tp["fc2_b"]))


# ---------------------------------------------------------------------------
# pure-JAX reference mirroring the PyTorch module (NCHW), for verification.
# ---------------------------------------------------------------------------
def torch_reference(x, p):
    def layernorm2d(v, w, b):
        mu = v.mean(1, keepdims=True)
        var = ((v - mu) ** 2).mean(1, keepdims=True)
        vn = (v - mu) / jnp.sqrt(var + _EPS)
        return w[None, :, None, None] * vn + b[None, :, None, None]

    def conv2d(v, w, b, groups):
        pad = (w.shape[2] - 1) // 2
        out = jax.lax.conv_general_dilated(
            v, w, window_strides=(1, 1), padding=[(pad, pad), (pad, pad)],
            dimension_numbers=("NCHW", "OIHW", "NCHW"),
            feature_group_count=groups)
        return out + b[None, :, None, None]

    C = x.shape[1]
    h = layernorm2d(x, p["ln1_w"], p["ln1_b"])
    x = x + conv2d(h, p["attn_w"], p["attn_b"], groups=C)
    h = layernorm2d(x, p["ln2_w"], p["ln2_b"])
    h = conv2d(h, p["fc1_w"], p["fc1_b"], groups=1)
    h = conv2d(h, p["dw_w"], p["dw_b"], groups=C)
    h = 0.5 * h * (1.0 + jax.scipy.special.erf(h * _SQRT_HALF))  # exact GELU
    h = conv2d(h, p["fc2_w"], p["fc2_b"], groups=1)
    return x + h


if __name__ == "__main__":
    B, C, H, W = 2, 4, 16, 16
    key = jax.random.PRNGKey(0)
    kx, kp = jax.random.split(key)
    x = jax.random.normal(kx, (B, C, H, W), jnp.float32)

    tparams = init_torch_params(kp, C)
    kparams = to_kernel_params(tparams)

    # reference first (defensive, since the kernel may alias x's buffer)
    ref = jax.block_until_ready(torch_reference(x, tparams))

    out = jax.block_until_ready(swin_block(x, kparams))

    np.testing.assert_allclose(np.asarray(out), np.asarray(ref),
                               rtol=1e-4, atol=1e-4)
    print("KERNEL_OK")
</pallas_src>

<mosaic_0001>
module attributes {stable_mosaic.version = 11 : i64} {
  func.func @_swin_block_kernel(%arg0: i32, %arg1: memref<1x4x256xf32, #tpu.memory_space<vmem>>, %arg2: memref<2x256xi32, #tpu.memory_space<vmem>>, %arg3: memref<4x1xf32, #tpu.memory_space<vmem>>, %arg4: memref<4x1xf32, #tpu.memory_space<vmem>>, %arg5: memref<9x4x1xf32, #tpu.memory_space<vmem>>, %arg6: memref<4x1xf32, #tpu.memory_space<vmem>>, %arg7: memref<4x4xf32, #tpu.memory_space<vmem>>, %arg8: memref<4x1xf32, #tpu.memory_space<vmem>>, %arg9: memref<9x4x1xf32, #tpu.memory_space<vmem>>, %arg10: memref<4x1xf32, #tpu.memory_space<vmem>>, %arg11: memref<4x4xf32, #tpu.memory_space<vmem>>, %arg12: memref<4x1xf32, #tpu.memory_space<vmem>>, %arg13: memref<1x4x256xf32, #tpu.memory_space<vmem>>) attributes {dimension_semantics = [#tpu.dimension_semantics<parallel>], iteration_bounds = array<i64: 2>, scalar_prefetch = 0 : i64, scratch_operands = 0 : i64, tpu.core_type = #tpu.core_type<tc>, window_params = [{transform_indices = @transform_0, window_bounds = array<i64: 1, 4, 256>}, {pipeline_mode = #tpu.pipeline_mode<synchronous>, transform_indices = @transform_1, window_bounds = array<i64: 2, 256>}, {pipeline_mode = #tpu.pipeline_mode<synchronous>, transform_indices = @transform_2, window_bounds = array<i64: 4, 1>}, {pipeline_mode = #tpu.pipeline_mode<synchronous>, transform_indices = @transform_3, window_bounds = array<i64: 4, 1>}, {pipeline_mode = #tpu.pipeline_mode<synchronous>, transform_indices = @transform_4, window_bounds = array<i64: 9, 4, 1>}, {pipeline_mode = #tpu.pipeline_mode<synchronous>, transform_indices = @transform_5, window_bounds = array<i64: 4, 1>}, {pipeline_mode = #tpu.pipeline_mode<synchronous>, transform_indices = @transform_6, window_bounds = array<i64: 4, 4>}, {pipeline_mode = #tpu.pipeline_mode<synchronous>, transform_indices = @transform_7, window_bounds = array<i64: 4, 1>}, {pipeline_mode = #tpu.pipeline_mode<synchronous>, transform_indices = @transform_8, window_bounds = array<i64: 9, 4, 1>}, {pipeline_mode = #tpu.pipeline_mode<synchronous>, transform_indices = @transform_9, window_bounds = array<i64: 4, 1>}, {pipeline_mode = #tpu.pipeline_mode<synchronous>, transform_indices = @transform_10, window_bounds = array<i64: 4, 4>}, {pipeline_mode = #tpu.pipeline_mode<synchronous>, transform_indices = @transform_11, window_bounds = array<i64: 4, 1>}, {transform_indices = @transform_12, window_bounds = array<i64: 1, 4, 256>}]} {
    %c0 = arith.constant 0 : index
    %c0_0 = arith.constant 0 : index
    %c0_1 = arith.constant 0 : index
    %0 = vector.load %arg1[%c0, %c0_0, %c0_1] : memref<1x4x256xf32, #tpu.memory_space<vmem>>, vector<1x4x256xf32>
    %1 = vector.shape_cast %0 : vector<1x4x256xf32> to vector<4x256xf32>
    %c0_2 = arith.constant 0 : index
    %c0_3 = arith.constant 0 : index
    %2 = vector.load %arg2[%c0_2, %c0_3] : memref<2x256xi32, #tpu.memory_space<vmem>>, vector<1x256xi32>
    %c1 = arith.constant 1 : index
    %c0_4 = arith.constant 0 : index
    %3 = vector.load %arg2[%c1, %c0_4] : memref<2x256xi32, #tpu.memory_space<vmem>>, vector<1x256xi32>
    %c1_i32 = arith.constant 1 : i32
    %4 = vector.broadcast %c1_i32 : i32 to vector<1x256xi32>
    %5 = arith.cmpi sge, %2, %4 : vector<1x256xi32>
    %6 = arith.extui %5 : vector<1x256xi1> to vector<1x256xi32>
    %7 = arith.sitofp %6 : vector<1x256xi32> to vector<1x256xf32>
    %c14_i32 = arith.constant 14 : i32
    %8 = vector.broadcast %c14_i32 : i32 to vector<1x256xi32>
    %9 = arith.cmpi sle, %2, %8 : vector<1x256xi32>
    %10 = arith.extui %9 : vector<1x256xi1> to vector<1x256xi32>
    %11 = arith.sitofp %10 : vector<1x256xi32> to vector<1x256xf32>
    %c1_i32_5 = arith.constant 1 : i32
    %12 = vector.broadcast %c1_i32_5 : i32 to vector<1x256xi32>
    %13 = arith.cmpi sge, %3, %12 : vector<1x256xi32>
    %14 = arith.extui %13 : vector<1x256xi1> to vector<1x256xi32>
    %15 = arith.sitofp %14 : vector<1x256xi32> to vector<1x256xf32>
    %c14_i32_6 = arith.constant 14 : i32
    %16 = vector.broadcast %c14_i32_6 : i32 to vector<1x256xi32>
    %17 = arith.cmpi sle, %3, %16 : vector<1x256xi32>
    %18 = arith.extui %17 : vector<1x256xi1> to vector<1x256xi32>
    %19 = arith.sitofp %18 : vector<1x256xi32> to vector<1x256xf32>
    %20 = arith.mulf %7, %15 : vector<1x256xf32>
    %21 = arith.mulf %7, %19 : vector<1x256xf32>
    %22 = arith.mulf %11, %15 : vector<1x256xf32>
    %23 = arith.mulf %11, %19 : vector<1x256xf32>
    %cst = arith.constant dense<0.000000e+00> : vector<256xf32>
    %24 = vector.multi_reduction <add>, %1, %cst [0] : vector<4x256xf32> to vector<256xf32>
    %25 = vector.shape_cast %24 : vector<256xf32> to vector<1x256xf32>
    %cst_7 = arith.constant 4.000000e+00 : f32
    %26 = vector.broadcast %cst_7 : f32 to vector<1x256xf32>
    %27 = arith.divf %25, %26 : vector<1x256xf32>
    %28 = vector.broadcast %27 : vector<1x256xf32> to vector<4x256xf32>
    %29 = arith.subf %1, %28 : vector<4x256xf32>
    %30 = arith.mulf %29, %29 : vector<4x256xf32>
    %cst_8 = arith.constant dense<0.000000e+00> : vector<256xf32>
    %31 = vector.multi_reduction <add>, %30, %cst_8 [0] : vector<4x256xf32> to vector<256xf32>
    %32 = vector.shape_cast %31 : vector<256xf32> to vector<1x256xf32>
    %cst_9 = arith.constant 4.000000e+00 : f32
    %33 = vector.broadcast %cst_9 : f32 to vector<1x256xf32>
    %34 = arith.divf %32, %33 : vector<1x256xf32>
    %cst_10 = arith.constant 9.99999997E-7 : f32
    %35 = vector.broadcast %cst_10 : f32 to vector<1x256xf32>
    %36 = arith.addf %34, %35 : vector<1x256xf32>
    %37 = math.rsqrt %36 : vector<1x256xf32>
    %38 = vector.broadcast %37 : vector<1x256xf32> to vector<4x256xf32>
    %39 = arith.mulf %29, %38 : vector<4x256xf32>
    %c0_11 = arith.constant 0 : index
    %c0_12 = arith.constant 0 : index
    %40 = vector.load %arg3[%c0_11, %c0_12] : memref<4x1xf32, #tpu.memory_space<vmem>>, vector<4x1xf32>
    %41 = vector.broadcast %40 : vector<4x1xf32> to vector<4x256xf32>
    %42 = arith.mulf %39, %41 : vector<4x256xf32>
    %c0_13 = arith.constant 0 : index
    %c0_14 = arith.constant 0 : index
    %43 = vector.load %arg4[%c0_13, %c0_14] : memref<4x1xf32, #tpu.memory_space<vmem>>, vector<4x1xf32>
    %44 = vector.broadcast %43 : vector<4x1xf32> to vector<4x256xf32>
    %45 = arith.addf %42, %44 : vector<4x256xf32>
    %c0_15 = arith.constant 0 : index
    %c0_16 = arith.constant 0 : index
    %46 = vector.load %arg6[%c0_15, %c0_16] : memref<4x1xf32, #tpu.memory_space<vmem>>, vector<4x1xf32>
    %c4 = arith.constant 4 : index
    %c0_17 = arith.constant 0 : index
    %c0_18 = arith.constant 0 : index
    %47 = vector.load %arg5[%c4, %c0_17, %c0_18] : memref<9x4x1xf32, #tpu.memory_space<vmem>>, vector<1x4x1xf32>
    %48 = vector.shape_cast %47 : vector<1x4x1xf32> to vector<4x1xf32>
    %49 = vector.broadcast %48 : vector<4x1xf32> to vector<4x256xf32>
    %50 = arith.mulf %45, %49 : vector<4x256xf32>
    %51 = vector.broadcast %46 : vector<4x1xf32> to vector<4x256xf32>
    %52 = arith.addf %50, %51 : vector<4x256xf32>
    %c17_i32 = arith.constant 17 : i32
    %53 = tpu.dynamic_rotate %45 by %c17_i32 dim 1 : vector<4x256xf32>, i32 -> vector<4x256xf32>
    %54 = vector.broadcast %20 : vector<1x256xf32> to vector<4x256xf32>
    %55 = arith.mulf %53, %54 : vector<4x256xf32>
    %c0_19 = arith.constant 0 : index
    %c0_20 = arith.constant 0 : index
    %c0_21 = arith.constant 0 : index
    %56 = vector.load %arg5[%c0_19, %c0_20, %c0_21] : memref<9x4x1xf32, #tpu.memory_space<vmem>>, vector<1x4x1xf32>
    %57 = vector.shape_cast %56 : vector<1x4x1xf32> to vector<4x1xf32>
    %58 = vector.broadcast %57 : vector<4x1xf32> to vector<4x256xf32>
    %59 = arith.mulf %55, %58 : vector<4x256xf32>
    %60 = arith.addf %52, %59 : vector<4x256xf32>
    %c16_i32 = arith.constant 16 : i32
    %61 = tpu.dynamic_rotate %45 by %c16_i32 dim 1 : vector<4x256xf32>, i32 -> vector<4x256xf32>
    %62 = vector.broadcast %7 : vector<1x256xf32> to vector<4x256xf32>
    %63 = arith.mulf %61, %62 : vector<4x256xf32>
    %c1_22 = arith.constant 1 : index
    %c0_23 = arith.constant 0 : index
    %c0_24 = arith.constant 0 : index
    %64 = vector.load %arg5[%c1_22, %c0_23, %c0_24] : memref<9x4x1xf32, #tpu.memory_space<vmem>>, vector<1x4x1xf32>
    %65 = vector.shape_cast %64 : vector<1x4x1xf32> to vector<4x1xf32>
    %66 = vector.broadcast %65 : vector<4x1xf32> to vector<4x256xf32>
    %67 = arith.mulf %63, %66 : vector<4x256xf32>
    %68 = arith.addf %60, %67 : vector<4x256xf32>
    %c15_i32 = arith.constant 15 : i32
    %69 = tpu.dynamic_rotate %45 by %c15_i32 dim 1 : vector<4x256xf32>, i32 -> vector<4x256xf32>
    %70 = vector.broadcast %21 : vector<1x256xf32> to vector<4x256xf32>
    %71 = arith.mulf %69, %70 : vector<4x256xf32>
    %c2 = arith.constant 2 : index
    %c0_25 = arith.constant 0 : index
    %c0_26 = arith.constant 0 : index
    %72 = vector.load %arg5[%c2, %c0_25, %c0_26] : memref<9x4x1xf32, #tpu.memory_space<vmem>>, vector<1x4x1xf32>
    %73 = vector.shape_cast %72 : vector<1x4x1xf32> to vector<4x1xf32>
    %74 = vector.broadcast %73 : vector<4x1xf32> to vector<4x256xf32>
    %75 = arith.mulf %71, %74 : vector<4x256xf32>
    %76 = arith.addf %68, %75 : vector<4x256xf32>
    %c1_i32_27 = arith.constant 1 : i32
    %77 = tpu.dynamic_rotate %45 by %c1_i32_27 dim 1 : vector<4x256xf32>, i32 -> vector<4x256xf32>
    %78 = vector.broadcast %15 : vector<1x256xf32> to vector<4x256xf32>
    %79 = arith.mulf %77, %78 : vector<4x256xf32>
    %c3 = arith.constant 3 : index
    %c0_28 = arith.constant 0 : index
    %c0_29 = arith.constant 0 : index
    %80 = vector.load %arg5[%c3, %c0_28, %c0_29] : memref<9x4x1xf32, #tpu.memory_space<vmem>>, vector<1x4x1xf32>
    %81 = vector.shape_cast %80 : vector<1x4x1xf32> to vector<4x1xf32>
    %82 = vector.broadcast %81 : vector<4x1xf32> to vector<4x256xf32>
    %83 = arith.mulf %79, %82 : vector<4x256xf32>
    %84 = arith.addf %76, %83 : vector<4x256xf32>
    %c255_i32 = arith.constant 255 : i32
    %85 = tpu.dynamic_rotate %45 by %c255_i32 dim 1 : vector<4x256xf32>, i32 -> vector<4x256xf32>
    %86 = vector.broadcast %19 : vector<1x256xf32> to vector<4x256xf32>
    %87 = arith.mulf %85, %86 : vector<4x256xf32>
    %c5 = arith.constant 5 : index
    %c0_30 = arith.constant 0 : index
    %c0_31 = arith.constant 0 : index
    %88 = vector.load %arg5[%c5, %c0_30, %c0_31] : memref<9x4x1xf32, #tpu.memory_space<vmem>>, vector<1x4x1xf32>
    %89 = vector.shape_cast %88 : vector<1x4x1xf32> to vector<4x1xf32>
    %90 = vector.broadcast %89 : vector<4x1xf32> to vector<4x256xf32>
    %91 = arith.mulf %87, %90 : vector<4x256xf32>
    %92 = arith.addf %84, %91 : vector<4x256xf32>
    %c241_i32 = arith.constant 241 : i32
    %93 = tpu.dynamic_rotate %45 by %c241_i32 dim 1 : vector<4x256xf32>, i32 -> vector<4x256xf32>
    %94 = vector.broadcast %22 : vector<1x256xf32> to vector<4x256xf32>
    %95 = arith.mulf %93, %94 : vector<4x256xf32>
    %c6 = arith.constant 6 : index
    %c0_32 = arith.constant 0 : index
    %c0_33 = arith.constant 0 : index
    %96 = vector.load %arg5[%c6, %c0_32, %c0_33] : memref<9x4x1xf32, #tpu.memory_space<vmem>>, vector<1x4x1xf32>
    %97 = vector.shape_cast %96 : vector<1x4x1xf32> to vector<4x1xf32>
    %98 = vector.broadcast %97 : vector<4x1xf32> to vector<4x256xf32>
    %99 = arith.mulf %95, %98 : vector<4x256xf32>
    %100 = arith.addf %92, %99 : vector<4x256xf32>
    %c240_i32 = arith.constant 240 : i32
    %101 = tpu.dynamic_rotate %45 by %c240_i32 dim 1 : vector<4x256xf32>, i32 -> vector<4x256xf32>
    %102 = vector.broadcast %11 : vector<1x256xf32> to vector<4x256xf32>
    %103 = arith.mulf %101, %102 : vector<4x256xf32>
    %c7 = arith.constant 7 : index
    %c0_34 = arith.constant 0 : index
    %c0_35 = arith.constant 0 : index
    %104 = vector.load %arg5[%c7, %c0_34, %c0_35] : memref<9x4x1xf32, #tpu.memory_space<vmem>>, vector<1x4x1xf32>
    %105 = vector.shape_cast %104 : vector<1x4x1xf32> to vector<4x1xf32>
    %106 = vector.broadcast %105 : vector<4x1xf32> to vector<4x256xf32>
    %107 = arith.mulf %103, %106 : vector<4x256xf32>
    %108 = arith.addf %100, %107 : vector<4x256xf32>
    %c239_i32 = arith.constant 239 : i32
    %109 = tpu.dynamic_rotate %45 by %c239_i32 dim 1 : vector<4x256xf32>, i32 -> vector<4x256xf32>
    %110 = vector.broadcast %23 : vector<1x256xf32> to vector<4x256xf32>
    %111 = arith.mulf %109, %110 : vector<4x256xf32>
    %c8 = arith.constant 8 : index
    %c0_36 = arith.constant 0 : index
    %c0_37 = arith.constant 0 : index
    %112 = vector.load %arg5[%c8, %c0_36, %c0_37] : memref<9x4x1xf32, #tpu.memory_space<vmem>>, vector<1x4x1xf32>
    %113 = vector.shape_cast %112 : vector<1x4x1xf32> to vector<4x1xf32>
    %114 = vector.broadcast %113 : vector<4x1xf32> to vector<4x256xf32>
    %115 = arith.mulf %111, %114 : vector<4x256xf32>
    %116 = arith.addf %108, %115 : vector<4x256xf32>
    %117 = arith.addf %1, %116 : vector<4x256xf32>
    %cst_38 = arith.constant dense<0.000000e+00> : vector<256xf32>
    %118 = vector.multi_reduction <add>, %117, %cst_38 [0] : vector<4x256xf32> to vector<256xf32>
    %119 = vector.shape_cast %118 : vector<256xf32> to vector<1x256xf32>
    %cst_39 = arith.constant 4.000000e+00 : f32
    %120 = vector.broadcast %cst_39 : f32 to vector<1x256xf32>
    %121 = arith.divf %119, %120 : vector<1x256xf32>
    %122 = vector.broadcast %121 : vector<1x256xf32> to vector<4x256xf32>
    %123 = arith.subf %117, %122 : vector<4x256xf32>
    %124 = arith.mulf %123, %123 : vector<4x256xf32>
    %cst_40 = arith.constant dense<0.000000e+00> : vector<256xf32>
    %125 = vector.multi_reduction <add>, %124, %cst_40 [0] : vector<4x256xf32> to vector<256xf32>
    %126 = vector.shape_cast %125 : vector<256xf32> to vector<1x256xf32>
    %cst_41 = arith.constant 4.000000e+00 : f32
    %127 = vector.broadcast %cst_41 : f32 to vector<1x256xf32>
    %128 = arith.divf %126, %127 : vector<1x256xf32>
    %cst_42 = arith.constant 9.99999997E-7 : f32
    %129 = vector.broadcast %cst_42 : f32 to vector<1x256xf32>
    %130 = arith.addf %128, %129 : vector<1x256xf32>
    %131 = math.rsqrt %130 : vector<1x256xf32>
    %132 = vector.broadcast %131 : vector<1x256xf32> to vector<4x256xf32>
    %133 = arith.mulf %123, %132 : vector<4x256xf32>
    %c0_43 = arith.constant 0 : index
    %c0_44 = arith.constant 0 : index
    %134 = vector.load %arg7[%c0_43, %c0_44] : memref<4x4xf32, #tpu.memory_space<vmem>>, vector<4x4xf32>
    %c0_45 = arith.constant 0 : index
    %c0_46 = arith.constant 0 : index
    %135 = vector.load %arg8[%c0_45, %c0_46] : memref<4x1xf32, #tpu.memory_space<vmem>>, vector<4x1xf32>
    %cst_47 = arith.constant dense<0.000000e+00> : vector<4x256xf32>
    %136 = tpu.matmul %134, %133, %cst_47 {dimension_numbers = #tpu.dot_dimension_numbers<[1], [0], [0], [1], [0, 0, 1, 1], [], []>} : vector<4x4xf32>, vector<4x256xf32>, vector<4x256xf32> -> vector<4x256xf32>
    %137 = vector.broadcast %135 : vector<4x1xf32> to vector<4x256xf32>
    %138 = arith.addf %136, %137 : vector<4x256xf32>
    %c0_48 = arith.constant 0 : index
    %c0_49 = arith.constant 0 : index
    %139 = vector.load %arg10[%c0_48, %c0_49] : memref<4x1xf32, #tpu.memory_space<vmem>>, vector<4x1xf32>
    %c4_50 = arith.constant 4 : index
    %c0_51 = arith.constant 0 : index
    %c0_52 = arith.constant 0 : index
    %140 = vector.load %arg9[%c4_50, %c0_51, %c0_52] : memref<9x4x1xf32, #tpu.memory_space<vmem>>, vector<1x4x1xf32>
    %141 = vector.shape_cast %140 : vector<1x4x1xf32> to vector<4x1xf32>
    %142 = vector.broadcast %141 : vector<4x1xf32> to vector<4x256xf32>
    %143 = arith.mulf %138, %142 : vector<4x256xf32>
    %144 = vector.broadcast %139 : vector<4x1xf32> to vector<4x256xf32>
    %145 = arith.addf %143, %144 : vector<4x256xf32>
    %c17_i32_53 = arith.constant 17 : i32
    %146 = tpu.dynamic_rotate %138 by %c17_i32_53 dim 1 : vector<4x256xf32>, i32 -> vector<4x256xf32>
    %147 = vector.broadcast %20 : vector<1x256xf32> to vector<4x256xf32>
    %148 = arith.mulf %146, %147 : vector<4x256xf32>
    %c0_54 = arith.constant 0 : index
    %c0_55 = arith.constant 0 : index
    %c0_56 = arith.constant 0 : index
    %149 = vector.load %arg9[%c0_54, %c0_55, %c0_56] : memref<9x4x1xf32, #tpu.memory_space<vmem>>, vector<1x4x1xf32>
    %150 = vector.shape_cast %149 : vector<1x4x1xf32> to vector<4x1xf32>
    %151 = vector.broadcast %150 : vector<4x1xf32> to vector<4x256xf32>
    %152 = arith.mulf %148, %151 : vector<4x256xf32>
    %153 = arith.addf %145, %152 : vector<4x256xf32>
    %c16_i32_57 = arith.constant 16 : i32
    %154 = tpu.dynamic_rotate %138 by %c16_i32_57 dim 1 : vector<4x256xf32>, i32 -> vector<4x256xf32>
    %155 = vector.broadcast %7 : vector<1x256xf32> to vector<4x256xf32>
    %156 = arith.mulf %154, %155 : vector<4x256xf32>
    %c1_58 = arith.constant 1 : index
    %c0_59 = arith.constant 0 : index
    %c0_60 = arith.constant 0 : index
    %157 = vector.load %arg9[%c1_58, %c0_59, %c0_60] : memref<9x4x1xf32, #tpu.memory_space<vmem>>, vector<1x4x1xf32>
    %158 = vector.shape_cast %157 : vector<1x4x1xf32> to vector<4x1xf32>
    %159 = vector.broadcast %158 : vector<4x1xf32> to vector<4x256xf32>
    %160 = arith.mulf %156, %159 : vector<4x256xf32>
    %161 = arith.addf %153, %160 : vector<4x256xf32>
    %c15_i32_61 = arith.constant 15 : i32
    %162 = tpu.dynamic_rotate %138 by %c15_i32_61 dim 1 : vector<4x256xf32>, i32 -> vector<4x256xf32>
    %163 = vector.broadcast %21 : vector<1x256xf32> to vector<4x256xf32>
    %164 = arith.mulf %162, %163 : vector<4x256xf32>
    %c2_62 = arith.constant 2 : index
    %c0_63 = arith.constant 0 : index
    %c0_64 = arith.constant 0 : index
    %165 = vector.load %arg9[%c2_62, %c0_63, %c0_64] : memref<9x4x1xf32, #tpu.memory_space<vmem>>, vector<1x4x1xf32>
    %166 = vector.shape_cast %165 : vector<1x4x1xf32> to vector<4x1xf32>
    %167 = vector.broadcast %166 : vector<4x1xf32> to vector<4x256xf32>
    %168 = arith.mulf %164, %167 : vector<4x256xf32>
    %169 = arith.addf %161, %168 : vector<4x256xf32>
    %c1_i32_65 = arith.constant 1 : i32
    %170 = tpu.dynamic_rotate %138 by %c1_i32_65 dim 1 : vector<4x256xf32>, i32 -> vector<4x256xf32>
    %171 = vector.broadcast %15 : vector<1x256xf32> to vector<4x256xf32>
    %172 = arith.mulf %170, %171 : vector<4x256xf32>
    %c3_66 = arith.constant 3 : index
    %c0_67 = arith.constant 0 : index
    %c0_68 = arith.constant 0 : index
    %173 = vector.load %arg9[%c3_66, %c0_67, %c0_68] : memref<9x4x1xf32, #tpu.memory_space<vmem>>, vector<1x4x1xf32>
    %174 = vector.shape_cast %173 : vector<1x4x1xf32> to vector<4x1xf32>
    %175 = vector.broadcast %174 : vector<4x1xf32> to vector<4x256xf32>
    %176 = arith.mulf %172, %175 : vector<4x256xf32>
    %177 = arith.addf %169, %176 : vector<4x256xf32>
    %c255_i32_69 = arith.constant 255 : i32
    %178 = tpu.dynamic_rotate %138 by %c255_i32_69 dim 1 : vector<4x256xf32>, i32 -> vector<4x256xf32>
    %179 = vector.broadcast %19 : vector<1x256xf32> to vector<4x256xf32>
    %180 = arith.mulf %178, %179 : vector<4x256xf32>
    %c5_70 = arith.constant 5 : index
    %c0_71 = arith.constant 0 : index
    %c0_72 = arith.constant 0 : index
    %181 = vector.load %arg9[%c5_70, %c0_71, %c0_72] : memref<9x4x1xf32, #tpu.memory_space<vmem>>, vector<1x4x1xf32>
    %182 = vector.shape_cast %181 : vector<1x4x1xf32> to vector<4x1xf32>
    %183 = vector.broadcast %182 : vector<4x1xf32> to vector<4x256xf32>
    %184 = arith.mulf %180, %183 : vector<4x256xf32>
    %185 = arith.addf %177, %184 : vector<4x256xf32>
    %c241_i32_73 = arith.constant 241 : i32
    %186 = tpu.dynamic_rotate %138 by %c241_i32_73 dim 1 : vector<4x256xf32>, i32 -> vector<4x256xf32>
    %187 = vector.broadcast %22 : vector<1x256xf32> to vector<4x256xf32>
    %188 = arith.mulf %186, %187 : vector<4x256xf32>
    %c6_74 = arith.constant 6 : index
    %c0_75 = arith.constant 0 : index
    %c0_76 = arith.constant 0 : index
    %189 = vector.load %arg9[%c6_74, %c0_75, %c0_76] : memref<9x4x1xf32, #tpu.memory_space<vmem>>, vector<1x4x1xf32>
    %190 = vector.shape_cast %189 : vector<1x4x1xf32> to vector<4x1xf32>
    %191 = vector.broadcast %190 : vector<4x1xf32> to vector<4x256xf32>
    %192 = arith.mulf %188, %191 : vector<4x256xf32>
    %193 = arith.addf %185, %192 : vector<4x256xf32>
    %c240_i32_77 = arith.constant 240 : i32
    %194 = tpu.dynamic_rotate %138 by %c240_i32_77 dim 1 : vector<4x256xf32>, i32 -> vector<4x256xf32>
    %195 = vector.broadcast %11 : vector<1x256xf32> to vector<4x256xf32>
    %196 = arith.mulf %194, %195 : vector<4x256xf32>
    %c7_78 = arith.constant 7 : index
    %c0_79 = arith.constant 0 : index
    %c0_80 = arith.constant 0 : index
    %197 = vector.load %arg9[%c7_78, %c0_79, %c0_80] : memref<9x4x1xf32, #tpu.memory_space<vmem>>, vector<1x4x1xf32>
    %198 = vector.shape_cast %197 : vector<1x4x1xf32> to vector<4x1xf32>
    %199 = vector.broadcast %198 : vector<4x1xf32> to vector<4x256xf32>
    %200 = arith.mulf %196, %199 : vector<4x256xf32>
    %201 = arith.addf %193, %200 : vector<4x256xf32>
    %c239_i32_81 = arith.constant 239 : i32
    %202 = tpu.dynamic_rotate %138 by %c239_i32_81 dim 1 : vector<4x256xf32>, i32 -> vector<4x256xf32>
    %203 = vector.broadcast %23 : vector<1x256xf32> to vector<4x256xf32>
    %204 = arith.mulf %202, %203 : vector<4x256xf32>
    %c8_82 = arith.constant 8 : index
    %c0_83 = arith.constant 0 : index
    %c0_84 = arith.constant 0 : index
    %205 = vector.load %arg9[%c8_82, %c0_83, %c0_84] : memref<9x4x1xf32, #tpu.memory_space<vmem>>, vector<1x4x1xf32>
    %206 = vector.shape_cast %205 : vector<1x4x1xf32> to vector<4x1xf32>
    %207 = vector.broadcast %206 : vector<4x1xf32> to vector<4x256xf32>
    %208 = arith.mulf %204, %207 : vector<4x256xf32>
    %209 = arith.addf %201, %208 : vector<4x256xf32>
    %cst_85 = arith.constant 5.000000e-01 : f32
    %210 = vector.broadcast %cst_85 : f32 to vector<4x256xf32>
    %211 = arith.mulf %210, %209 : vector<4x256xf32>
    %cst_86 = arith.constant 0.707106769 : f32
    %212 = vector.broadcast %cst_86 : f32 to vector<4x256xf32>
    %213 = arith.mulf %209, %212 : vector<4x256xf32>
    %cst_87 = arith.constant 0.000000e+00 : f32
    %214 = vector.broadcast %cst_87 : f32 to vector<4x256xf32>
    %215 = arith.cmpf oge, %213, %214 : vector<4x256xf32>
    %cst_88 = arith.constant 1.000000e+00 : f32
    %cst_89 = arith.constant -1.000000e+00 : f32
    %216 = vector.broadcast %cst_88 : f32 to vector<4x256xf32>
    %217 = vector.broadcast %cst_89 : f32 to vector<4x256xf32>
    %218 = arith.select %215, %216, %217 : vector<4x256xi1>, vector<4x256xf32>
    %219 = math.absf %213 : vector<4x256xf32>
    %cst_90 = arith.constant 0.327591091 : f32
    %220 = vector.broadcast %cst_90 : f32 to vector<4x256xf32>
    %221 = arith.mulf %220, %219 : vector<4x256xf32>
    %cst_91 = arith.constant 1.000000e+00 : f32
    %222 = vector.broadcast %cst_91 : f32 to vector<4x256xf32>
    %223 = arith.addf %222, %221 : vector<4x256xf32>
    %224 = tpu.reciprocal %223 : vector<4x256xf32> -> vector<4x256xf32>
    %cst_92 = arith.constant 1.06140542 : f32
    %225 = vector.broadcast %cst_92 : f32 to vector<4x256xf32>
    %226 = arith.mulf %225, %224 : vector<4x256xf32>
    %cst_93 = arith.constant -1.45315206 : f32
    %227 = vector.broadcast %cst_93 : f32 to vector<4x256xf32>
    %228 = arith.addf %226, %227 : vector<4x256xf32>
    %229 = arith.mulf %228, %224 : vector<4x256xf32>
    %cst_94 = arith.constant 1.42141378 : f32
    %230 = vector.broadcast %cst_94 : f32 to vector<4x256xf32>
    %231 = arith.addf %229, %230 : vector<4x256xf32>
    %232 = arith.mulf %231, %224 : vector<4x256xf32>
    %cst_95 = arith.constant -0.284496725 : f32
    %233 = vector.broadcast %cst_95 : f32 to vector<4x256xf32>
    %234 = arith.addf %232, %233 : vector<4x256xf32>
    %235 = arith.mulf %234, %224 : vector<4x256xf32>
    %cst_96 = arith.constant 0.254829586 : f32
    %236 = vector.broadcast %cst_96 : f32 to vector<4x256xf32>
    %237 = arith.addf %235, %236 : vector<4x256xf32>
    %238 = arith.mulf %237, %224 : vector<4x256xf32>
    %cst_97 = arith.constant 0.000000e+00 : f32
    %239 = vector.broadcast %cst_97 : f32 to vector<4x256xf32>
    %240 = arith.subf %239, %219 : vector<4x256xf32>
    %241 = arith.mulf %240, %219 : vector<4x256xf32>
    %242 = math.exp %241 : vector<4x256xf32>
    %243 = arith.mulf %238, %242 : vector<4x256xf32>
    %cst_98 = arith.constant 1.000000e+00 : f32
    %244 = vector.broadcast %cst_98 : f32 to vector<4x256xf32>
    %245 = arith.subf %244, %243 : vector<4x256xf32>
    %246 = arith.mulf %218, %245 : vector<4x256xf32>
    %cst_99 = arith.constant 1.000000e+00 : f32
    %247 = vector.broadcast %cst_99 : f32 to vector<4x256xf32>
    %248 = arith.addf %247, %246 : vector<4x256xf32>
    %249 = arith.mulf %211, %248 : vector<4x256xf32>
    %c0_100 = arith.constant 0 : index
    %c0_101 = arith.constant 0 : index
    %250 = vector.load %arg11[%c0_100, %c0_101] : memref<4x4xf32, #tpu.memory_space<vmem>>, vector<4x4xf32>
    %c0_102 = arith.constant 0 : index
    %c0_103 = arith.constant 0 : index
    %251 = vector.load %arg12[%c0_102, %c0_103] : memref<4x1xf32, #tpu.memory_space<vmem>>, vector<4x1xf32>
    %cst_104 = arith.constant dense<0.000000e+00> : vector<4x256xf32>
    %252 = tpu.matmul %250, %249, %cst_104 {dimension_numbers = #tpu.dot_dimension_numbers<[1], [0], [0], [1], [0, 0, 1, 1], [], []>} : vector<4x4xf32>, vector<4x256xf32>, vector<4x256xf32> -> vector<4x256xf32>
    %253 = vector.broadcast %251 : vector<4x1xf32> to vector<4x256xf32>
    %254 = arith.addf %252, %253 : vector<4x256xf32>
    %255 = arith.addf %117, %254 : vector<4x256xf32>
    %c0_105 = arith.constant 0 : index
    %c0_106 = arith.constant 0 : index
    %c0_107 = arith.constant 0 : index
    %256 = vector.load %arg13[%c0_105, %c0_106, %c0_107] : memref<1x4x256xf32, #tpu.memory_space<vmem>>, vector<1x4x256xf32>
    %257 = vector.shape_cast %256 : vector<1x4x256xf32> to vector<4x256xf32>
    %258 = vector.shape_cast %255 : vector<4x256xf32> to vector<1x4x256xf32>
    tpu.vector_store %arg13[%c0_105, %c0_106, %c0_107], %258 {strides = array<i32>} : memref<1x4x256xf32, #tpu.memory_space<vmem>>, vector<1x4x256xf32>,
    return
  }
  func.func @transform_0(%arg0: i32) -> (i32, i32, i32) {
    %c0_i32 = arith.constant 0 : i32
    %c0_i32_0 = arith.constant 0 : i32
    %c0_i32_1 = arith.constant 0 : i32
    return %arg0, %c0_i32, %c0_i32_0 : i32, i32, i32
  }
  func.func @transform_1(%arg0: i32) -> (i32, i32) {
    %c0_i32 = arith.constant 0 : i32
    %c0_i32_0 = arith.constant 0 : i32
    %c0_i32_1 = arith.constant 0 : i32
    return %c0_i32, %c0_i32_0 : i32, i32
  }
  func.func @transform_2(%arg0: i32) -> (i32, i32) {
    %c0_i32 = arith.constant 0 : i32
    %c0_i32_0 = arith.constant 0 : i32
    %c0_i32_1 = arith.constant 0 : i32
    return %c0_i32, %c0_i32_0 : i32, i32
  }
  func.func @transform_3(%arg0: i32) -> (i32, i32) {
    %c0_i32 = arith.constant 0 : i32
    %c0_i32_0 = arith.constant 0 : i32
    %c0_i32_1 = arith.constant 0 : i32
    return %c0_i32, %c0_i32_0 : i32, i32
  }
  func.func @transform_4(%arg0: i32) -> (i32, i32, i32) {
    %c0_i32 = arith.constant 0 : i32
    %c0_i32_0 = arith.constant 0 : i32
    %c0_i32_1 = arith.constant 0 : i32
    %c0_i32_2 = arith.constant 0 : i32
    return %c0_i32, %c0_i32_0, %c0_i32_1 : i32, i32, i32
  }
  func.func @transform_5(%arg0: i32) -> (i32, i32) {
    %c0_i32 = arith.constant 0 : i32
    %c0_i32_0 = arith.constant 0 : i32
    %c0_i32_1 = arith.constant 0 : i32
    return %c0_i32, %c0_i32_0 : i32, i32
  }
  func.func @transform_6(%arg0: i32) -> (i32, i32) {
    %c0_i32 = arith.constant 0 : i32
    %c0_i32_0 = arith.constant 0 : i32
    %c0_i32_1 = arith.constant 0 : i32
    return %c0_i32, %c0_i32_0 : i32, i32
  }
  func.func @transform_7(%arg0: i32) -> (i32, i32) {
    %c0_i32 = arith.constant 0 : i32
    %c0_i32_0 = arith.constant 0 : i32
    %c0_i32_1 = arith.constant 0 : i32
    return %c0_i32, %c0_i32_0 : i32, i32
  }
  func.func @transform_8(%arg0: i32) -> (i32, i32, i32) {
    %c0_i32 = arith.constant 0 : i32
    %c0_i32_0 = arith.constant 0 : i32
    %c0_i32_1 = arith.constant 0 : i32
    %c0_i32_2 = arith.constant 0 : i32
    return %c0_i32, %c0_i32_0, %c0_i32_1 : i32, i32, i32
  }
  func.func @transform_9(%arg0: i32) -> (i32, i32) {
    %c0_i32 = arith.constant 0 : i32
    %c0_i32_0 = arith.constant 0 : i32
    %c0_i32_1 = arith.constant 0 : i32
    return %c0_i32, %c0_i32_0 : i32, i32
  }
  func.func @transform_10(%arg0: i32) -> (i32, i32) {
    %c0_i32 = arith.constant 0 : i32
    %c0_i32_0 = arith.constant 0 : i32
    %c0_i32_1 = arith.constant 0 : i32
    return %c0_i32, %c0_i32_0 : i32, i32
  }
  func.func @transform_11(%arg0: i32) -> (i32, i32) {
    %c0_i32 = arith.constant 0 : i32
    %c0_i32_0 = arith.constant 0 : i32
    %c0_i32_1 = arith.constant 0 : i32
    return %c0_i32, %c0_i32_0 : i32, i32
  }
  func.func @transform_12(%arg0: i32) -> (i32, i32, i32) {
    %c0_i32 = arith.constant 0 : i32
    %c0_i32_0 = arith.constant 0 : i32
    %c0_i32_1 = arith.constant 0 : i32
    return %arg0, %c0_i32, %c0_i32_0 : i32, i32, i32
  }
}

</mosaic_0001>

<llo_original>
// kernel: swin_block.1
$region0: #{swin_block.1}
  #allocation0 [shape = 'u32[]', space=smem, size = 0x4, offset = 0x4, fixed_abs, tag = 'smem constant byte address 0x4 - core index']
  #allocation1 [shape = 'u32[144,128]{1,0:T(1,128)}', space=vmem, size = 0x12000, scoped, tag = 'internal scratch']
  %s0 = inlined_call_operand.vmem [shape: f32[2,4,256], index: 0, kind: input, shape index: {}, may-alias: {0,12}]
  %s1 = inlined_call_operand.vmem [shape: s32[2,256], index: 1, kind: input, shape index: {}]
  %s2 = inlined_call_operand.vmem [shape: f32[4,1], index: 2, kind: input, shape index: {}]
  %s3 = inlined_call_operand.vmem [shape: f32[4,1], index: 3, kind: input, shape index: {}]
  %s4 = inlined_call_operand.vmem [shape: f32[9,4,1], index: 4, kind: input, shape index: {}]
  %s5 = inlined_call_operand.vmem [shape: f32[4,1], index: 5, kind: input, shape index: {}]
  %s6 = inlined_call_operand.vmem [shape: f32[4,4], index: 6, kind: input, shape index: {}]
  %s7 = inlined_call_operand.vmem [shape: f32[4,1], index: 7, kind: input, shape index: {}]
  %s8 = inlined_call_operand.vmem [shape: f32[9,4,1], index: 8, kind: input, shape index: {}]
  %s9 = inlined_call_operand.vmem [shape: f32[4,1], index: 9, kind: input, shape index: {}]
  %s10 = inlined_call_operand.vmem [shape: f32[4,4], index: 10, kind: input, shape index: {}]
  %s11 = inlined_call_operand.vmem [shape: f32[4,1], index: 11, kind: input, shape index: {}]
  %s12 = inlined_call_operand.vmem [shape: f32[2,4,256], index: 12, kind: output, shape index: {}, may-alias: {0,12}]
  %s13 = sld [smem:[#allocation0]]
  $region81: #{swin_block.1} parent=0
    _
  %s15 = ssub.s32 1, %s13
  %s16 = scalar_select 0, %s15, %s13
  loop: start=0, step=1, limit=4
  $region2: #{swin_block.1} parent=0 // loop_pre_header
    _
  $region3: #{swin_block.1} parent=0 // loop_header
    %s18 = sphi 0, %s22
    %p19 = scmp.ge.s32.totalorder %s18, 4
    %s28 = sphi 0, %s30
    %s31 = sphi 0, %s28
    %s32 = sphi 0, %s31
    %s48 = sphi 0, %s32
    %s52 = sphi 0, %s52
    %s54 = sphi 0, %s52
    %s55 = sphi 0, %s54
    %s69 = sphi 0, %s55
    %s73 = sphi 0, %s73
    %s75 = sphi 0, %s73
    %s76 = sphi 0, %s75
    %s90 = sphi 0, %s76
    %s94 = sphi 0, %s94
    %s96 = sphi 0, %s94
    %s97 = sphi 0, %s96
    %s111 = sphi 0, %s97
    %s115 = sphi 0, %s115
    %s117 = sphi 0, %s115
    %s118 = sphi 0, %s117
    %s132 = sphi 0, %s118
    %s136 = sphi 0, %s136
    %s138 = sphi 0, %s136
    %s139 = sphi 0, %s138
    %s153 = sphi 0, %s139
    %s157 = sphi 0, %s157
    %s159 = sphi 0, %s157
    %s160 = sphi 0, %s159
    %s174 = sphi 0, %s160
    %s178 = sphi 0, %s178
    %s180 = sphi 0, %s178
    %s181 = sphi 0, %s180
    %s195 = sphi 0, %s181
    %s199 = sphi 0, %s199
    %s201 = sphi 0, %s199
    %s202 = sphi 0, %s201
    %s216 = sphi 0, %s202
    %s220 = sphi 0, %s220
    %s222 = sphi 0, %s220
    %s223 = sphi 0, %s222
    %s237 = sphi 0, %s223
    %s241 = sphi 0, %s241
    %s243 = sphi 0, %s241
    %s244 = sphi 0, %s243
    %s258 = sphi 0, %s244
    %s262 = sphi 0, %s262
    %s264 = sphi 0, %s262
    %s265 = sphi 0, %s264
    %s279 = sphi 0, %s265
    %s285 = sphi 0, %s287
    %s288 = sphi 0, %s285
    %s289 = sphi 0, %s288
    %s305 = sphi 0, %s289
  $region4: #{swin_block.1} parent=0 // loop_header_branch
    %21 = sbr.rel (%p19) target = $region8
  $region5: #{swin_block.1} parent=0 // loop_body
    %s23 = ssub.s32 %s18, 1
    %s24 = ssub.s32 %s18, 2
    %s25 = sadd.s32 %s18, 1
    %s26 = ssub.s32 %s18, %s25
    %p27 = scmp.eq.s32.totalorder %s26, 0
    %s29 = sadd.s32 %s28, 1
    %s30 = scalar_select %p27, %s28, %s29
    %p33 = pneg %p27
    %p34 = scmp.eq.s32.totalorder %s18, 1
    %p35 = por %p33, %p34
    %p36 = scmp.ne.s32.totalorder %s28, %s31
    %p37 = scmp.eq.s32.totalorder %s18, 0
    %p38 = por %p36, %p37
    %p39 = scmp.ne.s32.totalorder %s28, %s31
    %p40 = scmp.eq.s32.totalorder %s23, 1
    %p41 = por %p39, %p40
    %p42 = scmp.ne.s32.totalorder %s31, %s32
    %p43 = scmp.eq.s32.totalorder %s23, 0
    %p44 = por %p42, %p43
    %p45 = scmp.ne.s32.totalorder %s31, %s32
    %p46 = scmp.eq.s32.totalorder %s24, 1
    %p47 = por %p45, %p46
    %p49 = scmp.ne.s32.totalorder %s32, %s48
    %p50 = scmp.eq.s32.totalorder %s24, 0
    %p51 = por %p49, %p50
    %s53 = sadd.s32 %s52, 1
    %p56 = scmp.eq.s32.totalorder %s18, 1
    %p57 = scmp.ne.s32.totalorder %s52, %s54
    %p58 = scmp.eq.s32.totalorder %s18, 0
    %p59 = por %p57, %p58
    %p60 = scmp.ne.s32.totalorder %s52, %s54
    %p61 = scmp.eq.s32.totalorder %s23, 1
    %p62 = por %p60, %p61
    %p63 = scmp.ne.s32.totalorder %s54, %s55
    %p64 = scmp.eq.s32.totalorder %s23, 0
    %p65 = por %p63, %p64
    %p66 = scmp.ne.s32.totalorder %s54, %s55
    %p67 = scmp.eq.s32.totalorder %s24, 1
    %p68 = por %p66, %p67
    %p70 = scmp.ne.s32.totalorder %s55, %s69
    %p71 = scmp.eq.s32.totalorder %s24, 0
    %p72 = por %p70, %p71
    %s74 = sadd.s32 %s73, 1
    %p77 = scmp.eq.s32.totalorder %s18, 1
    %p78 = scmp.ne.s32.totalorder %s73, %s75
    %p79 = scmp.eq.s32.totalorder %s18, 0
    %p80 = por %p78, %p79
    %p81 = scmp.ne.s32.totalorder %s73, %s75
    %p82 = scmp.eq.s32.totalorder %s23, 1
    %p83 = por %p81, %p82
    %p84 = scmp.ne.s32.totalorder %s75, %s76
    %p85 = scmp.eq.s32.totalorder %s23, 0
    %p86 = por %p84, %p85
    %p87 = scmp.ne.s32.totalorder %s75, %s76
    %p88 = scmp.eq.s32.totalorder %s24, 1
    %p89 = por %p87, %p88
    %p91 = scmp.ne.s32.totalorder %s76, %s90
    %p92 = scmp.eq.s32.totalorder %s24, 0
    %p93 = por %p91, %p92
    %s95 = sadd.s32 %s94, 1
    %p98 = scmp.eq.s32.totalorder %s18, 1
    %p99 = scmp.ne.s32.totalorder %s94, %s96
    %p100 = scmp.eq.s32.totalorder %s18, 0
    %p101 = por %p99, %p100
    %p102 = scmp.ne.s32.totalorder %s94, %s96
    %p103 = scmp.eq.s32.totalorder %s23, 1
    %p104 = por %p102, %p103
    %p105 = scmp.ne.s32.totalorder %s96, %s97
    %p106 = scmp.eq.s32.totalorder %s23, 0
    %p107 = por %p105, %p106
    %p108 = scmp.ne.s32.totalorder %s96, %s97
    %p109 = scmp.eq.s32.totalorder %s24, 1
    %p110 = por %p108, %p109
    %p112 = scmp.ne.s32.totalorder %s97, %s111
    %p113 = scmp.eq.s32.totalorder %s24, 0
    %p114 = por %p112, %p113
    %s116 = sadd.s32 %s115, 1
    %p119 = scmp.eq.s32.totalorder %s18, 1
    %p120 = scmp.ne.s32.totalorder %s115, %s117
    %p121 = scmp.eq.s32.totalorder %s18, 0
    %p122 = por %p120, %p121
    %p123 = scmp.ne.s32.totalorder %s115, %s117
    %p124 = scmp.eq.s32.totalorder %s23, 1
    %p125 = por %p123, %p124
    %p126 = scmp.ne.s32.totalorder %s117, %s118
    %p127 = scmp.eq.s32.totalorder %s23, 0
    %p128 = por %p126, %p127
    %p129 = scmp.ne.s32.totalorder %s117, %s118
    %p130 = scmp.eq.s32.totalorder %s24, 1
    %p131 = por %p129, %p130
    %p133 = scmp.ne.s32.totalorder %s118, %s132
    %p134 = scmp.eq.s32.totalorder %s24, 0
    %p135 = por %p133, %p134
    %s137 = sadd.s32 %s136, 1
    %p140 = scmp.eq.s32.totalorder %s18, 1
    %p141 = scmp.ne.s32.totalorder %s136, %s138
    %p142 = scmp.eq.s32.totalorder %s18, 0
    %p143 = por %p141, %p142
    %p144 = scmp.ne.s32.totalorder %s136, %s138
    %p145 = scmp.eq.s32.totalorder %s23, 1
    %p146 = por %p144, %p145
    %p147 = scmp.ne.s32.totalorder %s138, %s139
    %p148 = scmp.eq.s32.totalorder %s23, 0
    %p149 = por %p147, %p148
    %p150 = scmp.ne.s32.totalorder %s138, %s139
    %p151 = scmp.eq.s32.totalorder %s24, 1
    %p152 = por %p150, %p151
    %p154 = scmp.ne.s32.totalorder %s139, %s153
    %p155 = scmp.eq.s32.totalorder %s24, 0
    %p156 = por %p154, %p155
    %s158 = sadd.s32 %s157, 1
    %p161 = scmp.eq.s32.totalorder %s18, 1
    %p162 = scmp.ne.s32.totalorder %s157, %s159
    %p163 = scmp.eq.s32.totalorder %s18, 0
    %p164 = por %p162, %p163
    %p165 = scmp.ne.s32.totalorder %s157, %s159
    %p166 = scmp.eq.s32.totalorder %s23, 1
    %p167 = por %p165, %p166
    %p168 = scmp.ne.s32.totalorder %s159, %s160
    %p169 = scmp.eq.s32.totalorder %s23, 0
    %p170 = por %p168, %p169
    %p171 = scmp.ne.s32.totalorder %s159, %s160
    %p172 = scmp.eq.s32.totalorder %s24, 1
    %p173 = por %p171, %p172
    %p175 = scmp.ne.s32.totalorder %s160, %s174
    %p176 = scmp.eq.s32.totalorder %s24, 0
    %p177 = por %p175, %p176
    %s179 = sadd.s32 %s178, 1
    %p182 = scmp.eq.s32.totalorder %s18, 1
    %p183 = scmp.ne.s32.totalorder %s178, %s180
    %p184 = scmp.eq.s32.totalorder %s18, 0
    %p185 = por %p183, %p184
    %p186 = scmp.ne.s32.totalorder %s178, %s180
    %p187 = scmp.eq.s32.totalorder %s23, 1
    %p188 = por %p186, %p187
    %p189 = scmp.ne.s32.totalorder %s180, %s181
    %p190 = scmp.eq.s32.totalorder %s23, 0
    %p191 = por %p189, %p190
    %p192 = scmp.ne.s32.totalorder %s180, %s181
    %p193 = scmp.eq.s32.totalorder %s24, 1
    %p194 = por %p192, %p193
    %p196 = scmp.ne.s32.totalorder %s181, %s195
    %p197 = scmp.eq.s32.totalorder %s24, 0
    %p198 = por %p196, %p197
    %s200 = sadd.s32 %s199, 1
    %p203 = scmp.eq.s32.totalorder %s18, 1
    %p204 = scmp.ne.s32.totalorder %s199, %s201
    %p205 = scmp.eq.s32.totalorder %s18, 0
    %p206 = por %p204, %p205
    %p207 = scmp.ne.s32.totalorder %s199, %s201
    %p208 = scmp.eq.s32.totalorder %s23, 1
    %p209 = por %p207, %p208
    %p210 = scmp.ne.s32.totalorder %s201, %s202
    %p211 = scmp.eq.s32.totalorder %s23, 0
    %p212 = por %p210, %p211
    %p213 = scmp.ne.s32.totalorder %s201, %s202
    %p214 = scmp.eq.s32.totalorder %s24, 1
    %p215 = por %p213, %p214
    %p217 = scmp.ne.s32.totalorder %s202, %s216
    %p218 = scmp.eq.s32.totalorder %s24, 0
    %p219 = por %p217, %p218
    %s221 = sadd.s32 %s220, 1
    %p224 = scmp.eq.s32.totalorder %s18, 1
    %p225 = scmp.ne.s32.totalorder %s220, %s222
    %p226 = scmp.eq.s32.totalorder %s18, 0
    %p227 = por %p225, %p226
    %p228 = scmp.ne.s32.totalorder %s220, %s222
    %p229 = scmp.eq.s32.totalorder %s23, 1
    %p230 = por %p228, %p229
    %p231 = scmp.ne.s32.totalorder %s222, %s223
    %p232 = scmp.eq.s32.totalorder %s23, 0
    %p233 = por %p231, %p232
    %p234 = scmp.ne.s32.totalorder %s222, %s223
    %p235 = scmp.eq.s32.totalorder %s24, 1
    %p236 = por %p234, %p235
    %p238 = scmp.ne.s32.totalorder %s223, %s237
    %p239 = scmp.eq.s32.totalorder %s24, 0
    %p240 = por %p238, %p239
    %s242 = sadd.s32 %s241, 1
    %p245 = scmp.eq.s32.totalorder %s18, 1
    %p246 = scmp.ne.s32.totalorder %s241, %s243
    %p247 = scmp.eq.s32.totalorder %s18, 0
    %p248 = por %p246, %p247
    %p249 = scmp.ne.s32.totalorder %s241, %s243
    %p250 = scmp.eq.s32.totalorder %s23, 1
    %p251 = por %p249, %p250
    %p252 = scmp.ne.s32.totalorder %s243, %s244
    %p253 = scmp.eq.s32.totalorder %s23, 0
    %p254 = por %p252, %p253
    %p255 = scmp.ne.s32.totalorder %s243, %s244
    %p256 = scmp.eq.s32.totalorder %s24, 1
    %p257 = por %p255, %p256
    %p259 = scmp.ne.s32.totalorder %s244, %s258
    %p260 = scmp.eq.s32.totalorder %s24, 0
    %p261 = por %p259, %p260
    %s263 = sadd.s32 %s262, 1
    %p266 = scmp.eq.s32.totalorder %s18, 1
    %p267 = scmp.ne.s32.totalorder %s262, %s264
    %p268 = scmp.eq.s32.totalorder %s18, 0
    %p269 = por %p267, %p268
    %p270 = scmp.ne.s32.totalorder %s262, %s264
    %p271 = scmp.eq.s32.totalorder %s23, 1
    %p272 = por %p270, %p271
    %p273 = scmp.ne.s32.totalorder %s264, %s265
    %p274 = scmp.eq.s32.totalorder %s23, 0
    %p275 = por %p273, %p274
    %p276 = scmp.ne.s32.totalorder %s264, %s265
    %p277 = scmp.eq.s32.totalorder %s24, 1
    %p278 = por %p276, %p277
    %p280 = scmp.ne.s32.totalorder %s265, %s279
    %p281 = scmp.eq.s32.totalorder %s24, 0
    %p282 = por %p280, %p281
    %s283 = ssub.s32 %s18, %s25
    %p284 = scmp.eq.s32.totalorder %s283, 0
    %s286 = sadd.s32 %s285, 1
    %s287 = scalar_select %p284, %s285, %s286
    %p290 = pneg %p284
    %p291 = scmp.eq.s32.totalorder %s18, 1
    %p292 = por %p290, %p291
    %p293 = scmp.ne.s32.totalorder %s285, %s288
    %p294 = scmp.eq.s32.totalorder %s18, 0
    %p295 = por %p293, %p294
    %p296 = scmp.ne.s32.totalorder %s285, %s288
    %p297 = scmp.eq.s32.totalorder %s23, 1
    %p298 = por %p296, %p297
    %p299 = scmp.ne.s32.totalorder %s288, %s289
    %p300 = scmp.eq.s32.totalorder %s23, 0
    %p301 = por %p299, %p300
    %p302 = scmp.ne.s32.totalorder %s288, %s289
    %p303 = scmp.eq.s32.totalorder %s24, 1
    %p304 = por %p302, %p303
    %p306 = scmp.ne.s32.totalorder %s289, %s305
    %p307 = scmp.eq.s32.totalorder %s24, 0
    %p308 = por %p306, %p307
    %p309 = scmp.le.s32.totalorder 1, %s18
    %p310 = scmp.lt.s32.totalorder %s18, 3
    %p311 = pnand %p309, %p310
    %p312 = pneg %p311
    // Predicated region
    $region9: #{swin_block.1} parent=5 // pred_check
      _
    $region10: #{swin_block.1} parent=5 // pred_check_branch
      %314 = sbr.rel (%p311) target = $region12
    $region11: #{swin_block.1} parent=5 // pred_region
      %s315 = ssub.s32 %s18, 1
      // Predicated region
      $region13: #{swin_block.1} parent=11 // pred_check
        %p316 = pneg %p65
      $region14: #{swin_block.1} parent=11 // pred_check_branch
        %318 = sbr.rel (%p316) target = $region16
      $region15: #{swin_block.1} parent=11 // pred_region
        _
      $region16: #{swin_block.1} parent=11 // pred_fallthru
        _
      // Predicated region
      $region17: #{swin_block.1} parent=11 // pred_check
        %p319 = pneg %p86
      $region18: #{swin_block.1} parent=11 // pred_check_branch
        %321 = sbr.rel (%p319) target = $region20
      $region19: #{swin_block.1} parent=11 // pred_region
        _
      $region20: #{swin_block.1} parent=11 // pred_fallthru
        _
      // Predicated region
      $region21: #{swin_block.1} parent=11 // pred_check
        %p322 = pneg %p107
      $region22: #{swin_block.1} parent=11 // pred_check_branch
        %324 = sbr.rel (%p322) target = $region24
      $region23: #{swin_block.1} parent=11 // pred_region
        _
      $region24: #{swin_block.1} parent=11 // pred_fallthru
        _
      // Predicated region
      $region25: #{swin_block.1} parent=11 // pred_check
        %p325 = pneg %p128
      $region26: #{swin_block.1} parent=11 // pred_check_branch
        %327 = sbr.rel (%p325) target = $region28
      $region27: #{swin_block.1} parent=11 // pred_region
        _
      $region28: #{swin_block.1} parent=11 // pred_fallthru
        _
      // Predicated region
      $region29: #{swin_block.1} parent=11 // pred_check
        %p328 = pneg %p149
      $region30: #{swin_block.1} parent=11 // pred_check_branch
        %330 = sbr.rel (%p328) target = $region32
      $region31: #{swin_block.1} parent=11 // pred_region
        _
      $region32: #{swin_block.1} parent=11 // pred_fallthru
        _
      // Predicated region
      $region33: #{swin_block.1} parent=11 // pred_check
        %p331 = pneg %p170
      $region34: #{swin_block.1} parent=11 // pred_check_branch
        %333 = sbr.rel (%p331) target = $region36
      $region35: #{swin_block.1} parent=11 // pred_region
        _
      $region36: #{swin_block.1} parent=11 // pred_fallthru
        _
      // Predicated region
      $region37: #{swin_block.1} parent=11 // pred_check
        %p334 = pneg %p191
      $region38: #{swin_block.1} parent=11 // pred_check_branch
        %336 = sbr.rel (%p334) target = $region40
      $region39: #{swin_block.1} parent=11 // pred_region
        _
      $region40: #{swin_block.1} parent=11 // pred_fallthru
        _
      // Predicated region
      $region41: #{swin_block.1} parent=11 // pred_check
        %p337 = pneg %p212
      $region42: #{swin_block.1} parent=11 // pred_check_branch
        %339 = sbr.rel (%p337) target = $region44
      $region43: #{swin_block.1} parent=11 // pred_region
        _
      $region44: #{swin_block.1} parent=11 // pred_fallthru
        _
      // Predicated region
      $region45: #{swin_block.1} parent=11 // pred_check
        %p340 = pneg %p233
      $region46: #{swin_block.1} parent=11 // pred_check_branch
        %342 = sbr.rel (%p340) target = $region48
      $region47: #{swin_block.1} parent=11 // pred_region
        _
      $region48: #{swin_block.1} parent=11 // pred_fallthru
        _
      // Predicated region
      $region49: #{swin_block.1} parent=11 // pred_check
        %p343 = pneg %p254
      $region50: #{swin_block.1} parent=11 // pred_check_branch
        %345 = sbr.rel (%p343) target = $region52
      $region51: #{swin_block.1} parent=11 // pred_region
        _
      $region52: #{swin_block.1} parent=11 // pred_fallthru
        _
      // Predicated region
      $region53: #{swin_block.1} parent=11 // pred_check
        %p346 = pneg %p275
      $region54: #{swin_block.1} parent=11 // pred_check_branch
        %348 = sbr.rel (%p346) target = $region56
      $region55: #{swin_block.1} parent=11 // pred_region
        _
      $region56: #{swin_block.1} parent=11 // pred_fallthru
        _
    $region12: #{swin_block.1} parent=5 // pred_fallthru
      _
    %p349 = scmp.lt.s32.totalorder %s18, 2
    // Predicated region
    $region57: #{swin_block.1} parent=5 // pred_check
      %p350 = pneg %p349
    $region58: #{swin_block.1} parent=5 // pred_check_branch
      %352 = sbr.rel (%p350) target = $region60
    $region59: #{swin_block.1} parent=5 // pred_region
      // Predicated region
      $region61: #{swin_block.1} parent=59 // pred_check
        %p353 = pneg %p38
      $region62: #{swin_block.1} parent=59 // pred_check_branch
        %355 = sbr.rel (%p353) target = $region64
      $region63: #{swin_block.1} parent=59 // pred_region
        %p356 = scmp.lt.s32.totalorder %s18, 1
        %s357 = scalar_select %p356, %s18, 1
        %s358 = smul.addr %s357, 2
        %s359 = smul.addr %s358, 4
        %s360 = scalar_lea.vmem %s0, %s359
      $region64: #{swin_block.1} parent=59 // pred_fallthru
        _
    $region60: #{swin_block.1} parent=5 // pred_fallthru
      _
    %p361 = scmp.le.s32.totalorder 1, %s18
    %p362 = scmp.lt.s32.totalorder %s18, 3
    %p363 = pnand %p361, %p362
    %p364 = pneg %p363
    // Predicated region
    $region65: #{swin_block.1} parent=5 // pred_check
      _
    $region66: #{swin_block.1} parent=5 // pred_check_branch
      %366 = sbr.rel (%p363) target = $region68
    $region67: #{swin_block.1} parent=5 // pred_region
      %s367 = ssub.s32 %s18, 1
      %p368 = scmp.lt.s32.totalorder %s23, 1
      %s369 = scalar_select %p368, %s23, 1
      %s370 = smul.addr %s369, 2
      %s371 = smul.addr %s370, 4
      %s372 = scalar_lea.vmem %s0, %s371
      %p373 = pneg %p44
      %p374 = pneg %p41
      %p375 = pneg %p65
      %p376 = pneg %p62
      %p377 = pneg %p86
      %p378 = pneg %p83
      %p379 = pneg %p107
      %p380 = pneg %p104
      %p381 = pneg %p128
      %p382 = pneg %p125
      %p383 = pneg %p149
      %p384 = pneg %p146
      %p385 = pneg %p170
      %p386 = pneg %p167
      %p387 = pneg %p191
      %p388 = pneg %p188
      %p389 = pneg %p212
      %p390 = pneg %p209
      %p391 = pneg %p233
      %p392 = pneg %p230
      %p393 = pneg %p254
      %p394 = pneg %p251
      %p395 = pneg %p275
      %p396 = pneg %p272
      %p397 = pneg %p301
      %p398 = pneg %p298
      %p399 = scmp.lt.s32.totalorder %s23, 1
      %s400 = scalar_select %p399, %s23, 1
      %s401 = smul.addr %s400, 2
      %s402 = smul.addr %s401, 4
      %s403 = scalar_lea.vmem %s12, %s402
      %p404 = scmp.lt.s32.totalorder %s23, 1
      %s405 = scalar_select %p404, %s23, 1
      %s406 = smul.addr %s405, 2
      %s407 = smul.addr %s406, 4
      %s408 = scalar_lea.vmem %s0, %s407
      %p409 = scmp.lt.s32.totalorder %s23, 1
      %s410 = scalar_select %p409, %s23, 1
      %s411 = smul.addr %s410, 2
      %s412 = smul.addr %s411, 4
      %s413 = scalar_lea.vmem %s12, %s412
      %v414 = vld [vmem:[%s408] sm:$0xff]
      %v415 = vld [vmem:[%s1] ss:$2 sm:$0x3]
      %s416 = scalar_lea.vmem %s1, 1
      %v417 = vld [vmem:[%s416] ss:$2 sm:$0x3]
      %vm418 = vcmp.ge.s32.totalorder %v415, 1
      %v419 = vsel %vm418, 1, 0
      %v420 = vcvt.s32.f32 %v419
      %vm421 = vcmp.le.s32.totalorder %v415, 14
      %v422 = vsel %vm421, 1, 0
      %v423 = vcvt.s32.f32 %v422
      %vm424 = vcmp.ge.s32.totalorder %v417, 1
      %v425 = vsel %vm424, 1, 0
      %v426 = vcvt.s32.f32 %v425
      %vm427 = vcmp.le.s32.totalorder %v417, 14
      %v428 = vsel %vm427, 1, 0
      %v429 = vcvt.s32.f32 %v428
      %v430 = vmul.f32 %v420, %v426
      %v431 = vmul.f32 %v420, %v429
      %v432 = vmul.f32 %v423, %v426
      %v433 = vmul.f32 %v423, %v429
      %v435 = vcombine.high %v414, %v414
      %vm437 = vcmask 1043456
      %v438 = vsel %vm437, %v414, 0.0
      %v439 = vrot.slane %v438, 4
      %v440 = vadd.f32 %v438, %v439
      %v441 = vrot.slane %v440, 2
      %v442 = vadd.f32 %v440, %v441
      %v443 = vrot.slane %v442, 1
      %v444 = vadd.f32 %v442, %v443
      %v445 = vsel %vm437, %v435, 0.0
      %v446 = vrot.slane %v445, 4
      %v447 = vadd.f32 %v445, %v446
      %v448 = vrot.slane %v447, 2
      %v449 = vadd.f32 %v447, %v448
      %v450 = vrot.slane %v449, 1
      %v451 = vadd.f32 %v449, %v450
      %v452 = vrcp.pop 4.0
      %v453 = vmul.f32 %v444, %v452
      %v454 = vmul.f32 %v451, %v452
      %v457 = vcombine.low %v453, %v454
      %v459 = vsub.f32 %v414, %v457
      %v460 = vmul.f32 %v459, %v459
      %v462 = vcombine.high %v460, %v460
      %v464 = vsel %vm437, %v460, 0.0
      %v465 = vrot.slane %v464, 4
      %v466 = vadd.f32 %v464, %v465
      %v467 = vrot.slane %v466, 2
      %v468 = vadd.f32 %v466, %v467
      %v469 = vrot.slane %v468, 1
      %v470 = vadd.f32 %v468, %v469
      %v471 = vsel %vm437, %v462, 0.0
      %v472 = vrot.slane %v471, 4
      %v473 = vadd.f32 %v471, %v472
      %v474 = vrot.slane %v473, 2
      %v475 = vadd.f32 %v473, %v474
      %v476 = vrot.slane %v475, 1
      %v477 = vadd.f32 %v475, %v476
      %v478 = vmul.f32 %v470, %v452
      %v479 = vmul.f32 %v477, %v452
      %v480 = vadd.f32 %v478, 1e-06
      %v481 = vadd.f32 %v479, 1e-06
      %v482 = vrsqrt.pop %v480
      %v483 = vrsqrt.pop %v481
      %v486 = vcombine.low %v482, %v483
      %v488 = vmul.f32 %v459, %v486
      %v489 = vld [vmem:[%s2] sm:$0xf]
      %491 = vset.pattern.permute.xlu0 0
      %492 = vperm.xlu0 %491, %v489
      %v493 = vpop.permute.xlu0 %492
      %v495 = vunpack.c.l.s4 839922192
      %v496 = vunpack.c.0.s8 %v495
      %v497 = vlaneseq
      %v498 = vshrl.u32 %v497, 7
      %v499 = vsub.s32 %v496, %v498
      %v500 = vrot.slane %v493, %v499
      %v502 = vmul.f32 %v488, %v500
      %v503 = vld [vmem:[%s3] sm:$0xf]
      %505 = vset.pattern.permute.xlu0 0
      %506 = vperm.xlu0 %505, %v503
      %v507 = vpop.permute.xlu0 %506
      %v509 = vunpack.c.l.s4 839922192
      %v510 = vunpack.c.0.s8 %v509
      %v511 = vlaneseq
      %v512 = vshrl.u32 %v511, 7
      %v513 = vsub.s32 %v510, %v512
      %v514 = vrot.slane %v507, %v513
      %v516 = vadd.f32 %v502, %v514
      %v517 = vld [vmem:[%s5] sm:$0xf]
      %s518 = scalar_lea.vmem %s4, 16
      %v519 = vld [vmem:[%s518] sm:$0xf]
      %521 = vset.pattern.permute.xlu0 0
      %522 = vperm.xlu0 %521, %v519
      %v523 = vpop.permute.xlu0 %522
      %v525 = vunpack.c.l.s4 839922192
      %v526 = vunpack.c.0.s8 %v525
      %v527 = vlaneseq
      %v528 = vshrl.u32 %v527, 7
      %v529 = vsub.s32 %v526, %v528
      %v530 = vrot.slane %v523, %v529
      %v532 = vmul.f32 %v516, %v530
      %534 = vset.pattern.permute.xlu0 0
      %535 = vperm.xlu0 %534, %v517
      %v536 = vpop.permute.xlu0 %535
      %v538 = vunpack.c.l.s4 839922192
      %v539 = vunpack.c.0.s8 %v538
      %v540 = vlaneseq
      %v541 = vshrl.u32 %v540, 7
      %v542 = vsub.s32 %v539, %v541
      %v543 = vrot.slane %v536, %v542
      %v545 = vadd.f32 %v532, %v543
      %v547 = vcombine.high %v516, %v516
      %549 = vrot.lane.b32.xlu0 %v516, 17
      %v550 = vpop.permute.xlu0 %549
      %551 = vrot.lane.b32.xlu0 %v547, 17
      %v552 = vpop.permute.xlu0 %551
      %v553 = vlaneseq
      %v554 = vand.u32 %v553, 127
      %vm555 = vcmp.lt.s32.totalorder %v554, 17
      %v556 = vsel %vm555, %v550, %v552
      %v557 = vsel %vm555, %v552, %v550
      %v559 = vlaneseq
      %v560 = vshrl.u32 %v559, 7
      %v561 = vsub.s32 0, %v560
      %v562 = vrot.slane %v430, %v561
      %v563 = vlaneseq
      %v564 = vshrl.u32 %v563, 7
      %v565 = vsub.s32 1, %v564
      %v566 = vrot.slane %v430, %v565
      %v569 = vmul.f32 %v557, %v562
      %v570 = vmul.f32 %v556, %v566
      %v571 = vld [vmem:[%s4] sm:$0xf]
      %573 = vset.pattern.permute.xlu0 0
      %574 = vperm.xlu0 %573, %v571
      %v575 = vpop.permute.xlu0 %574
      %v577 = vmul.f32 %v569, %v575
      %v578 = vmul.f32 %v570, %v575
      %v581 = vcombine.low %v577, %v578
      %v583 = vadd.f32 %v545, %v581
      %584 = vrot.lane.b32.xlu0 %v516, 16
      %v585 = vpop.permute.xlu0 %584
      %586 = vrot.lane.b32.xlu0 %v547, 16
      %v587 = vpop.permute.xlu0 %586
      %vm588 = vcmp.lt.s32.totalorder %v554, 16
      %v589 = vsel %vm588, %v585, %v587
      %v590 = vsel %vm588, %v587, %v585
      %v592 = vlaneseq
      %v593 = vshrl.u32 %v592, 7
      %v594 = vsub.s32 0, %v593
      %v595 = vrot.slane %v420, %v594
      %v596 = vlaneseq
      %v597 = vshrl.u32 %v596, 7
      %v598 = vsub.s32 1, %v597
      %v599 = vrot.slane %v420, %v598
      %v602 = vmul.f32 %v590, %v595
      %v603 = vmul.f32 %v589, %v599
      %s604 = scalar_lea.vmem %s4, 4
      %v605 = vld [vmem:[%s604] sm:$0xf]
      %607 = vset.pattern.permute.xlu0 0
      %608 = vperm.xlu0 %607, %v605
      %v609 = vpop.permute.xlu0 %608
      %v611 = vmul.f32 %v602, %v609
      %v612 = vmul.f32 %v603, %v609
      %v615 = vcombine.low %v611, %v612
      %v617 = vadd.f32 %v583, %v615
      %618 = vrot.lane.b32.xlu0 %v516, 15
      %v619 = vpop.permute.xlu0 %618
      %620 = vrot.lane.b32.xlu0 %v547, 15
      %v621 = vpop.permute.xlu0 %620
      %vm622 = vcmp.lt.s32.totalorder %v554, 15
      %v623 = vsel %vm622, %v619, %v621
      %v624 = vsel %vm622, %v621, %v619
      %v626 = vlaneseq
      %v627 = vshrl.u32 %v626, 7
      %v628 = vsub.s32 0, %v627
      %v629 = vrot.slane %v431, %v628
      %v630 = vlaneseq
      %v631 = vshrl.u32 %v630, 7
      %v632 = vsub.s32 1, %v631
      %v633 = vrot.slane %v431, %v632
      %v636 = vmul.f32 %v624, %v629
      %v637 = vmul.f32 %v623, %v633
      %s638 = scalar_lea.vmem %s4, 8
      %v639 = vld [vmem:[%s638] sm:$0xf]
      %641 = vset.pattern.permute.xlu0 0
      %642 = vperm.xlu0 %641, %v639
      %v643 = vpop.permute.xlu0 %642
      %v645 = vmul.f32 %v636, %v643
      %v646 = vmul.f32 %v637, %v643
      %v649 = vcombine.low %v645, %v646
      %v651 = vadd.f32 %v617, %v649
      %652 = vrot.lane.b32.xlu0 %v516, 1
      %v653 = vpop.permute.xlu0 %652
      %654 = vrot.lane.b32.xlu0 %v547, 1
      %v655 = vpop.permute.xlu0 %654
      %vm656 = vcmp.lt.s32.totalorder %v554, 1
      %v657 = vsel %vm656, %v653, %v655
      %v658 = vsel %vm656, %v655, %v653
      %v660 = vlaneseq
      %v661 = vshrl.u32 %v660, 7
      %v662 = vsub.s32 0, %v661
      %v663 = vrot.slane %v426, %v662
      %v664 = vlaneseq
      %v665 = vshrl.u32 %v664, 7
      %v666 = vsub.s32 1, %v665
      %v667 = vrot.slane %v426, %v666
      %v670 = vmul.f32 %v658, %v663
      %v671 = vmul.f32 %v657, %v667
      %s672 = scalar_lea.vmem %s4, 12
      %v673 = vld [vmem:[%s672] sm:$0xf]
      %675 = vset.pattern.permute.xlu0 0
      %676 = vperm.xlu0 %675, %v673
      %v677 = vpop.permute.xlu0 %676
      %v679 = vmul.f32 %v670, %v677
      %v680 = vmul.f32 %v671, %v677
      %v683 = vcombine.low %v679, %v680
      %v685 = vadd.f32 %v651, %v683
      %686 = vrot.lane.b32.xlu0 %v516, 127
      %v687 = vpop.permute.xlu0 %686
      %688 = vrot.lane.b32.xlu0 %v547, 127
      %v689 = vpop.permute.xlu0 %688
      %vm690 = vcmp.lt.s32.totalorder %v554, 127
      %v691 = vsel %vm690, %v687, %v689
      %v692 = vsel %vm690, %v689, %v687
      %v694 = vlaneseq
      %v695 = vshrl.u32 %v694, 7
      %v696 = vsub.s32 0, %v695
      %v697 = vrot.slane %v429, %v696
      %v698 = vlaneseq
      %v699 = vshrl.u32 %v698, 7
      %v700 = vsub.s32 1, %v699
      %v701 = vrot.slane %v429, %v700
      %v704 = vmul.f32 %v691, %v697
      %v705 = vmul.f32 %v692, %v701
      %s706 = scalar_lea.vmem %s4, 20
      %v707 = vld [vmem:[%s706] sm:$0xf]
      %709 = vset.pattern.permute.xlu0 0
      %710 = vperm.xlu0 %709, %v707
      %v711 = vpop.permute.xlu0 %710
      %v713 = vmul.f32 %v704, %v711
      %v714 = vmul.f32 %v705, %v711
      %v717 = vcombine.low %v713, %v714
      %v719 = vadd.f32 %v685, %v717
      %720 = vrot.lane.b32.xlu0 %v516, 113
      %v721 = vpop.permute.xlu0 %720
      %722 = vrot.lane.b32.xlu0 %v547, 113
      %v723 = vpop.permute.xlu0 %722
      %vm724 = vcmp.lt.s32.totalorder %v554, 113
      %v725 = vsel %vm724, %v721, %v723
      %v726 = vsel %vm724, %v723, %v721
      %v728 = vlaneseq
      %v729 = vshrl.u32 %v728, 7
      %v730 = vsub.s32 0, %v729
      %v731 = vrot.slane %v432, %v730
      %v732 = vlaneseq
      %v733 = vshrl.u32 %v732, 7
      %v734 = vsub.s32 1, %v733
      %v735 = vrot.slane %v432, %v734
      %v738 = vmul.f32 %v725, %v731
      %v739 = vmul.f32 %v726, %v735
      %s740 = scalar_lea.vmem %s4, 24
      %v741 = vld [vmem:[%s740] sm:$0xf]
      %743 = vset.pattern.permute.xlu0 0
      %744 = vperm.xlu0 %743, %v741
      %v745 = vpop.permute.xlu0 %744
      %v747 = vmul.f32 %v738, %v745
      %v748 = vmul.f32 %v739, %v745
      %v751 = vcombine.low %v747, %v748
      %v753 = vadd.f32 %v719, %v751
      %754 = vrot.lane.b32.xlu0 %v516, 112
      %v755 = vpop.permute.xlu0 %754
      %756 = vrot.lane.b32.xlu0 %v547, 112
      %v757 = vpop.permute.xlu0 %756
      %vm758 = vcmp.lt.s32.totalorder %v554, 112
      %v759 = vsel %vm758, %v755, %v757
      %v760 = vsel %vm758, %v757, %v755
      %v762 = vlaneseq
      %v763 = vshrl.u32 %v762, 7
      %v764 = vsub.s32 0, %v763
      %v765 = vrot.slane %v423, %v764
      %v766 = vlaneseq
      %v767 = vshrl.u32 %v766, 7
      %v768 = vsub.s32 1, %v767
      %v769 = vrot.slane %v423, %v768
      %v772 = vmul.f32 %v759, %v765
      %v773 = vmul.f32 %v760, %v769
      %s774 = scalar_lea.vmem %s4, 28
      %v775 = vld [vmem:[%s774] sm:$0xf]
      %777 = vset.pattern.permute.xlu0 0
      %778 = vperm.xlu0 %777, %v775
      %v779 = vpop.permute.xlu0 %778
      %v781 = vmul.f32 %v772, %v779
      %v782 = vmul.f32 %v773, %v779
      %v785 = vcombine.low %v781, %v782
      %v787 = vadd.f32 %v753, %v785
      %788 = vrot.lane.b32.xlu0 %v516, 111
      %v789 = vpop.permute.xlu0 %788
      %790 = vrot.lane.b32.xlu0 %v547, 111
      %v791 = vpop.permute.xlu0 %790
      %vm792 = vcmp.lt.s32.totalorder %v554, 111
      %v793 = vsel %vm792, %v789, %v791
      %v794 = vsel %vm792, %v791, %v789
      %v796 = vlaneseq
      %v797 = vshrl.u32 %v796, 7
      %v798 = vsub.s32 0, %v797
      %v799 = vrot.slane %v433, %v798
      %v800 = vlaneseq
      %v801 = vshrl.u32 %v800, 7
      %v802 = vsub.s32 1, %v801
      %v803 = vrot.slane %v433, %v802
      %v806 = vmul.f32 %v793, %v799
      %v807 = vmul.f32 %v794, %v803
      %s808 = scalar_lea.vmem %s4, 32
      %v809 = vld [vmem:[%s808] sm:$0xf]
      %811 = vset.pattern.permute.xlu0 0
      %812 = vperm.xlu0 %811, %v809
      %v813 = vpop.permute.xlu0 %812
      %v815 = vmul.f32 %v806, %v813
      %v816 = vmul.f32 %v807, %v813
      %v819 = vcombine.low %v815, %v816
      %v821 = vadd.f32 %v787, %v819
      %v822 = vadd.f32 %v414, %v821
      %v824 = vcombine.high %v822, %v822
      %v826 = vsel %vm437, %v822, 0.0
      %v827 = vrot.slane %v826, 4
      %v828 = vadd.f32 %v826, %v827
      %v829 = vrot.slane %v828, 2
      %v830 = vadd.f32 %v828, %v829
      %v831 = vrot.slane %v830, 1
      %v832 = vadd.f32 %v830, %v831
      %v833 = vsel %vm437, %v824, 0.0
      %v834 = vrot.slane %v833, 4
      %v835 = vadd.f32 %v833, %v834
      %v836 = vrot.slane %v835, 2
      %v837 = vadd.f32 %v835, %v836
      %v838 = vrot.slane %v837, 1
      %v839 = vadd.f32 %v837, %v838
      %v840 = vmul.f32 %v832, %v452
      %v841 = vmul.f32 %v839, %v452
      %v844 = vcombine.low %v840, %v841
      %v846 = vsub.f32 %v822, %v844
      %v847 = vmul.f32 %v846, %v846
      %v849 = vcombine.high %v847, %v847
      %v851 = vsel %vm437, %v847, 0.0
      %v852 = vrot.slane %v851, 4
      %v853 = vadd.f32 %v851, %v852
      %v854 = vrot.slane %v853, 2
      %v855 = vadd.f32 %v853, %v854
      %v856 = vrot.slane %v855, 1
      %v857 = vadd.f32 %v855, %v856
      %v858 = vsel %vm437, %v849, 0.0
      %v859 = vrot.slane %v858, 4
      %v860 = vadd.f32 %v858, %v859
      %v861 = vrot.slane %v860, 2
      %v862 = vadd.f32 %v860, %v861
      %v863 = vrot.slane %v862, 1
      %v864 = vadd.f32 %v862, %v863
      %v865 = vmul.f32 %v857, %v452
      %v866 = vmul.f32 %v864, %v452
      %v867 = vadd.f32 %v865, 1e-06
      %v868 = vadd.f32 %v866, 1e-06
      %v869 = vrsqrt.pop %v867
      %v870 = vrsqrt.pop %v868
      %v873 = vcombine.low %v869, %v870
      %v875 = vmul.f32 %v846, %v873
      %v876 = vld [vmem:[%s6] sm:$0xf]
      %v877 = vld [vmem:[%s7] sm:$0xf]
      %879 = vset.pattern.permute.xlu0 0
      %880 = vperm.xlu0 %879, %v877
      %v881 = vpop.permute.xlu0 %880
      %v884 = vcombine.high %v875, %v875
      %vm885 = vcmask 31744
      %v887 = vsel %vm885, %v876, 0
      %v889 = vsel %vm437, %v875, 0
      %v891 = vsel %vm437, %v884, 0
      %893 = vmatprep.subr.mxu0 %v891
      %894 = vmatpush1.msra.mxu0 %v889
      %895 = vmatprep.subr.mxu0 0.0
      %896 = vmatpush1.msra.mxu0 0.0
      %897 = vmatprep.subr.mxu0 0.0
      %898 = vmatpush1.msra.mxu0 0.0
      %899 = vmatprep.subr.mxu0 0.0
      %900 = vmatpush1.msra.mxu0 0.0
      %901 = vmatprep.subr.mxu0 0.0
      %902 = vmatpush1.msra.mxu0 0.0
      %903 = vmatprep.subr.mxu0 0.0
      %904 = vmatpush1.msra.mxu0 0.0
      %905 = vmatprep.subr.mxu0 0.0
      %906 = vmatpush1.msra.mxu0 0.0
      %907 = vmatprep.subr.mxu0 0.0
      %908 = vmatpush1.msra.mxu0 0.0
      %909 = vmatprep.subr.mxu0 0.0
      %910 = vmatpush1.msra.mxu0 0.0
      %911 = vmatprep.subr.mxu0 0.0
      %912 = vmatpush1.msra.mxu0 0.0
      %913 = vmatprep.subr.mxu0 0.0
      %914 = vmatpush1.msra.mxu0 0.0
      %915 = vmatprep.subr.mxu0 0.0
      %916 = vmatpush1.msra.mxu0 0.0
      %917 = vmatprep.subr.mxu0 0.0
      %918 = vmatpush1.msra.mxu0 0.0
      %919 = vmatprep.subr.mxu0 0.0
      %920 = vmatpush1.msra.mxu0 0.0
      %921 = vmatprep.subr.mxu0 0.0
      %922 = vmatpush1.msra.mxu0 0.0
      %923 = vmatprep.subr.mxu0 0.0
      %924 = vmatpush1.msra.mxu0 0.0
      %925 = vmatprep.subr.mxu0 0.0
      %926 = vmatpush1.msra.mxu0 0.0
      %927 = vmatprep.subr.mxu0 0.0
      %928 = vmatpush1.msra.mxu0 0.0
      %929 = vmatprep.subr.mxu0 0.0
      %930 = vmatpush1.msra.mxu0 0.0
      %931 = vmatprep.subr.mxu0 0.0
      %932 = vmatpush1.msra.mxu0 0.0
      %933 = vmatprep.subr.mxu0 0.0
      %934 = vmatpush1.msra.mxu0 0.0
      %935 = vmatprep.subr.mxu0 0.0
      %936 = vmatpush1.msra.mxu0 0.0
      %937 = vmatprep.subr.mxu0 0.0
      %938 = vmatpush1.msra.mxu0 0.0
      %939 = vmatprep.subr.mxu0 0.0
      %940 = vmatpush1.msra.mxu0 0.0
      %941 = vmatprep.subr.mxu0 0.0
      %942 = vmatpush1.msra.mxu0 0.0
      %943 = vmatprep.subr.mxu0 0.0
      %944 = vmatpush1.msra.mxu0 0.0
      %945 = vmatprep.subr.mxu0 0.0
      %946 = vmatpush1.msra.mxu0 0.0
      %947 = vmatprep.subr.mxu0 0.0
      %948 = vmatpush1.msra.mxu0 0.0
      %949 = vmatprep.subr.mxu0 0.0
      %950 = vmatpush1.msra.mxu0 0.0
      %951 = vmatprep.subr.mxu0 0.0
      %952 = vmatpush1.msra.mxu0 0.0
      %953 = vmatprep.subr.mxu0 0.0
      %954 = vmatpush1.msra.mxu0 0.0
      %955 = vmatprep.subr.mxu0 0.0
      %956 = vmatpush1.msra.mxu0 0.0
      %957 = vmatprep.mubr.f32.mxu0 0.0
      %958 = vmatmul.mubr.f32.gmra.mrb[0].mxu0 %v887
      %v959 = vpop.f32.mrb[0].mxu0
      %v960 = vadd.f32 %v881, %v959
      %v961 = vpop.f32.mrb[0].mxu0
      %v962 = vadd.f32 %v881, %v961
      %963 = vdwg.mxu0
      %v964 = vld [vmem:[%s9] sm:$0xf]
      %s965 = scalar_lea.vmem %s8, 16
      %v966 = vld [vmem:[%s965] sm:$0xf]
      %968 = vset.pattern.permute.xlu0 0
      %969 = vperm.xlu0 %968, %v966
      %v970 = vpop.permute.xlu0 %969
      %v972 = vmul.f32 %v960, %v970
      %v973 = vmul.f32 %v962, %v970
      %975 = vset.pattern.permute.xlu0 0
      %976 = vperm.xlu0 %975, %v964
      %v977 = vpop.permute.xlu0 %976
      %v979 = vadd.f32 %v972, %v977
      %v980 = vadd.f32 %v973, %v977
      %981 = vrot.lane.b32.xlu0 %v960, 17
      %v982 = vpop.permute.xlu0 %981
      %983 = vrot.lane.b32.xlu0 %v962, 17
      %v984 = vpop.permute.xlu0 %983
      %v985 = vsel %vm555, %v982, %v984
      %v986 = vsel %vm555, %v984, %v982
      %v987 = vmul.f32 %v986, %v562
      %v988 = vmul.f32 %v985, %v566
      %v989 = vld [vmem:[%s8] sm:$0xf]
      %991 = vset.pattern.permute.xlu0 0
      %992 = vperm.xlu0 %991, %v989
      %v993 = vpop.permute.xlu0 %992
      %v995 = vmul.f32 %v987, %v993
      %v996 = vmul.f32 %v988, %v993
      %v997 = vadd.f32 %v979, %v995
      %v998 = vadd.f32 %v980, %v996
      %999 = vrot.lane.b32.xlu0 %v960, 16
      %v1000 = vpop.permute.xlu0 %999
      %1001 = vrot.lane.b32.xlu0 %v962, 16
      %v1002 = vpop.permute.xlu0 %1001
      %v1003 = vsel %vm588, %v1000, %v1002
      %v1004 = vsel %vm588, %v1002, %v1000
      %v1005 = vmul.f32 %v1004, %v595
      %v1006 = vmul.f32 %v1003, %v599
      %s1007 = scalar_lea.vmem %s8, 4
      %v1008 = vld [vmem:[%s1007] sm:$0xf]
      %1010 = vset.pattern.permute.xlu0 0
      %1011 = vperm.xlu0 %1010, %v1008
      %v1012 = vpop.permute.xlu0 %1011
      %v1014 = vmul.f32 %v1005, %v1012
      %v1015 = vmul.f32 %v1006, %v1012
      %v1016 = vadd.f32 %v997, %v1014
      %v1017 = vadd.f32 %v998, %v1015
      %1018 = vrot.lane.b32.xlu0 %v960, 15
      %v1019 = vpop.permute.xlu0 %1018
      %1020 = vrot.lane.b32.xlu0 %v962, 15
      %v1021 = vpop.permute.xlu0 %1020
      %v1022 = vsel %vm622, %v1019, %v1021
      %v1023 = vsel %vm622, %v1021, %v1019
      %v1024 = vmul.f32 %v1023, %v629
      %v1025 = vmul.f32 %v1022, %v633
      %s1026 = scalar_lea.vmem %s8, 8
      %v1027 = vld [vmem:[%s1026] sm:$0xf]
      %1029 = vset.pattern.permute.xlu0 0
      %1030 = vperm.xlu0 %1029, %v1027
      %v1031 = vpop.permute.xlu0 %1030
      %v1033 = vmul.f32 %v1024, %v1031
      %v1034 = vmul.f32 %v1025, %v1031
      %v1035 = vadd.f32 %v1016, %v1033
      %v1036 = vadd.f32 %v1017, %v1034
      %1037 = vrot.lane.b32.xlu0 %v960, 1
      %v1038 = vpop.permute.xlu0 %1037
      %1039 = vrot.lane.b32.xlu0 %v962, 1
      %v1040 = vpop.permute.xlu0 %1039
      %v1041 = vsel %vm656, %v1038, %v1040
      %v1042 = vsel %vm656, %v1040, %v1038
      %v1043 = vmul.f32 %v1042, %v663
      %v1044 = vmul.f32 %v1041, %v667
      %s1045 = scalar_lea.vmem %s8, 12
      %v1046 = vld [vmem:[%s1045] sm:$0xf]
      %1048 = vset.pattern.permute.xlu0 0
      %1049 = vperm.xlu0 %1048, %v1046
      %v1050 = vpop.permute.xlu0 %1049
      %v1052 = vmul.f32 %v1043, %v1050
      %v1053 = vmul.f32 %v1044, %v1050
      %v1054 = vadd.f32 %v1035, %v1052
      %v1055 = vadd.f32 %v1036, %v1053
      %1056 = vrot.lane.b32.xlu0 %v960, 127
      %v1057 = vpop.permute.xlu0 %1056
      %1058 = vrot.lane.b32.xlu0 %v962, 127
      %v1059 = vpop.permute.xlu0 %1058
      %v1060 = vsel %vm690, %v1057, %v1059
      %v1061 = vsel %vm690, %v1059, %v1057
      %v1062 = vmul.f32 %v1060, %v697
      %v1063 = vmul.f32 %v1061, %v701
      %s1064 = scalar_lea.vmem %s8, 20
      %v1065 = vld [vmem:[%s1064] sm:$0xf]
      %1067 = vset.pattern.permute.xlu0 0
      %1068 = vperm.xlu0 %1067, %v1065
      %v1069 = vpop.permute.xlu0 %1068
      %v1071 = vmul.f32 %v1062, %v1069
      %v1072 = vmul.f32 %v1063, %v1069
      %v1073 = vadd.f32 %v1054, %v1071
      %v1074 = vadd.f32 %v1055, %v1072
      %1075 = vrot.lane.b32.xlu0 %v960, 113
      %v1076 = vpop.permute.xlu0 %1075
      %1077 = vrot.lane.b32.xlu0 %v962, 113
      %v1078 = vpop.permute.xlu0 %1077
      %v1079 = vsel %vm724, %v1076, %v1078
      %v1080 = vsel %vm724, %v1078, %v1076
      %v1081 = vmul.f32 %v1079, %v731
      %v1082 = vmul.f32 %v1080, %v735
      %s1083 = scalar_lea.vmem %s8, 24
      %v1084 = vld [vmem:[%s1083] sm:$0xf]
      %1086 = vset.pattern.permute.xlu0 0
      %1087 = vperm.xlu0 %1086, %v1084
      %v1088 = vpop.permute.xlu0 %1087
      %v1090 = vmul.f32 %v1081, %v1088
      %v1091 = vmul.f32 %v1082, %v1088
      %v1092 = vadd.f32 %v1073, %v1090
      %v1093 = vadd.f32 %v1074, %v1091
      %1094 = vrot.lane.b32.xlu0 %v960, 112
      %v1095 = vpop.permute.xlu0 %1094
      %1096 = vrot.lane.b32.xlu0 %v962, 112
      %v1097 = vpop.permute.xlu0 %1096
      %v1098 = vsel %vm758, %v1095, %v1097
      %v1099 = vsel %vm758, %v1097, %v1095
      %v1100 = vmul.f32 %v1098, %v765
      %v1101 = vmul.f32 %v1099, %v769
      %s1102 = scalar_lea.vmem %s8, 28
      %v1103 = vld [vmem:[%s1102] sm:$0xf]
      %1105 = vset.pattern.permute.xlu0 0
      %1106 = vperm.xlu0 %1105, %v1103
      %v1107 = vpop.permute.xlu0 %1106
      %v1109 = vmul.f32 %v1100, %v1107
      %v1110 = vmul.f32 %v1101, %v1107
      %v1111 = vadd.f32 %v1092, %v1109
      %v1112 = vadd.f32 %v1093, %v1110
      %1113 = vrot.lane.b32.xlu0 %v960, 111
      %v1114 = vpop.permute.xlu0 %1113
      %1115 = vrot.lane.b32.xlu0 %v962, 111
      %v1116 = vpop.permute.xlu0 %1115
      %v1117 = vsel %vm792, %v1114, %v1116
      %v1118 = vsel %vm792, %v1116, %v1114
      %v1119 = vmul.f32 %v1117, %v799
      %v1120 = vmul.f32 %v1118, %v803
      %s1121 = scalar_lea.vmem %s8, 32
      %v1122 = vld [vmem:[%s1121] sm:$0xf]
      %1124 = vset.pattern.permute.xlu0 0
      %1125 = vperm.xlu0 %1124, %v1122
      %v1126 = vpop.permute.xlu0 %1125
      %v1128 = vmul.f32 %v1119, %v1126
      %v1129 = vmul.f32 %v1120, %v1126
      %v1130 = vadd.f32 %v1111, %v1128
      %v1131 = vadd.f32 %v1112, %v1129
      %v1132 = vmul.f32 %v1130, 0.5
      %v1133 = vmul.f32 %v1131, 0.5
      %v1134 = vmul.f32 %v1130, 0.70710677
      %v1135 = vmul.f32 %v1131, 0.70710677
      %vm1136 = vcmp.ge.f32.partialorder %v1134, 0.0
      %vm1137 = vcmp.ge.f32.partialorder %v1135, 0.0
      %v1138 = vsel %vm1136, 1.0, -1.0
      %v1139 = vsel %vm1137, 1.0, -1.0
      %v1140 = vand.u32 2147483647, %v1134
      %v1141 = vand.u32 2147483647, %v1135
      %v1142 = vmul.f32 %v1140, 0.3275911
      %v1143 = vmul.f32 %v1141, 0.3275911
      %v1144 = vadd.f32 %v1142, 1.0
      %v1145 = vadd.f32 %v1143, 1.0
      %v1146 = vrcp.pop %v1144
      %v1147 = vrcp.pop %v1145
      %v1148 = vmul.f32 %v1146, 1.0614054
      %v1149 = vmul.f32 %v1147, 1.0614054
      %v1150 = vadd.f32 %v1148, -1.4531521
      %v1151 = vadd.f32 %v1149, -1.4531521
      %v1152 = vmul.f32 %v1150, %v1146
      %v1153 = vmul.f32 %v1151, %v1147
      %v1154 = vadd.f32 %v1152, 1.4214138
      %v1155 = vadd.f32 %v1153, 1.4214138
      %v1156 = vmul.f32 %v1154, %v1146
      %v1157 = vmul.f32 %v1155, %v1147
      %v1158 = vadd.f32 %v1156, -0.28449672
      %v1159 = vadd.f32 %v1157, -0.28449672
      %v1160 = vmul.f32 %v1158, %v1146
      %v1161 = vmul.f32 %v1159, %v1147
      %v1162 = vadd.f32 %v1160, 0.2548296
      %v1163 = vadd.f32 %v1161, 0.2548296
      %v1164 = vmul.f32 %v1162, %v1146
      %v1165 = vmul.f32 %v1163, %v1147
      %v1166 = vsub.f32 0.0, %v1140
      %v1167 = vsub.f32 0.0, %v1141
      %v1168 = vmul.f32 %v1166, %v1140
      %v1169 = vmul.f32 %v1167, %v1141
      %v1170 = vmul.f32 %v1168, 1.442695
      %v1171 = vpow.pop %v1170
      %v1172 = vmul.f32 %v1169, 1.442695
      %v1173 = vpow.pop %v1172
      %v1174 = vmul.f32 %v1164, %v1171
      %v1175 = vmul.f32 %v1165, %v1173
      %v1176 = vsub.f32 1.0, %v1174
      %v1177 = vsub.f32 1.0, %v1175
      %v1178 = vmul.f32 %v1138, %v1176
      %v1179 = vmul.f32 %v1139, %v1177
      %v1180 = vadd.f32 %v1178, 1.0
      %v1181 = vadd.f32 %v1179, 1.0
      %v1182 = vmul.f32 %v1132, %v1180
      %v1183 = vmul.f32 %v1133, %v1181
      %v1184 = vld [vmem:[%s10] sm:$0xf]
      %v1185 = vld [vmem:[%s11] sm:$0xf]
      %1187 = vset.pattern.permute.xlu0 0
      %1188 = vperm.xlu0 %1187, %v1185
      %v1189 = vpop.permute.xlu0 %1188
      %v1192 = vsel %vm885, %v1184, 0
      %v1195 = vsel %vm437, %v1182, 0
      %v1198 = vsel %vm437, %v1183, 0
      %1200 = vmatprep.subr.mxu0 %v1198
      %1201 = vmatpush1.msra.mxu0 %v1195
      %1202 = vmatprep.subr.mxu0 0.0
      %1203 = vmatpush1.msra.mxu0 0.0
      %1204 = vmatprep.subr.mxu0 0.0
      %1205 = vmatpush1.msra.mxu0 0.0
      %1206 = vmatprep.subr.mxu0 0.0
      %1207 = vmatpush1.msra.mxu0 0.0
      %1208 = vmatprep.subr.mxu0 0.0
      %1209 = vmatpush1.msra.mxu0 0.0
      %1210 = vmatprep.subr.mxu0 0.0
      %1211 = vmatpush1.msra.mxu0 0.0
      %1212 = vmatprep.subr.mxu0 0.0
      %1213 = vmatpush1.msra.mxu0 0.0
      %1214 = vmatprep.subr.mxu0 0.0
      %1215 = vmatpush1.msra.mxu0 0.0
      %1216 = vmatprep.subr.mxu0 0.0
      %1217 = vmatpush1.msra.mxu0 0.0
      %1218 = vmatprep.subr.mxu0 0.0
      %1219 = vmatpush1.msra.mxu0 0.0
      %1220 = vmatprep.subr.mxu0 0.0
      %1221 = vmatpush1.msra.mxu0 0.0
      %1222 = vmatprep.subr.mxu0 0.0
      %1223 = vmatpush1.msra.mxu0 0.0
      %1224 = vmatprep.subr.mxu0 0.0
      %1225 = vmatpush1.msra.mxu0 0.0
      %1226 = vmatprep.subr.mxu0 0.0
      %1227 = vmatpush1.msra.mxu0 0.0
      %1228 = vmatprep.subr.mxu0 0.0
      %1229 = vmatpush1.msra.mxu0 0.0
      %1230 = vmatprep.subr.mxu0 0.0
      %1231 = vmatpush1.msra.mxu0 0.0
      %1232 = vmatprep.subr.mxu0 0.0
      %1233 = vmatpush1.msra.mxu0 0.0
      %1234 = vmatprep.subr.mxu0 0.0
      %1235 = vmatpush1.msra.mxu0 0.0
      %1236 = vmatprep.subr.mxu0 0.0
      %1237 = vmatpush1.msra.mxu0 0.0
      %1238 = vmatprep.subr.mxu0 0.0
      %1239 = vmatpush1.msra.mxu0 0.0
      %1240 = vmatprep.subr.mxu0 0.0
      %1241 = vmatpush1.msra.mxu0 0.0
      %1242 = vmatprep.subr.mxu0 0.0
      %1243 = vmatpush1.msra.mxu0 0.0
      %1244 = vmatprep.subr.mxu0 0.0
      %1245 = vmatpush1.msra.mxu0 0.0
      %1246 = vmatprep.subr.mxu0 0.0
      %1247 = vmatpush1.msra.mxu0 0.0
      %1248 = vmatprep.subr.mxu0 0.0
      %1249 = vmatpush1.msra.mxu0 0.0
      %1250 = vmatprep.subr.mxu0 0.0
      %1251 = vmatpush1.msra.mxu0 0.0
      %1252 = vmatprep.subr.mxu0 0.0
      %1253 = vmatpush1.msra.mxu0 0.0
      %1254 = vmatprep.subr.mxu0 0.0
      %1255 = vmatpush1.msra.mxu0 0.0
      %1256 = vmatprep.subr.mxu0 0.0
      %1257 = vmatpush1.msra.mxu0 0.0
      %1258 = vmatprep.subr.mxu0 0.0
      %1259 = vmatpush1.msra.mxu0 0.0
      %1260 = vmatprep.subr.mxu0 0.0
      %1261 = vmatpush1.msra.mxu0 0.0
      %1262 = vmatprep.subr.mxu0 0.0
      %1263 = vmatpush1.msra.mxu0 0.0
      %1264 = vmatprep.mubr.f32.mxu0 0.0
      %1265 = vmatmul.mubr.f32.gmra.mrb[0].mxu0 %v1192
      %v1266 = vpop.f32.mrb[0].mxu0
      %v1267 = vadd.f32 %v1189, %v1266
      %v1268 = vpop.f32.mrb[0].mxu0
      %v1269 = vadd.f32 %v1189, %v1268
      %1270 = vdwg.mxu0
      %v1273 = vcombine.low %v1267, %v1269
      %v1275 = vadd.f32 %v822, %v1273
      %1276 = vst [vmem:[%s413] sm:$0xff] %v1275
      %p1277 = scmp.lt.s32.totalorder %s23, 1
      %s1278 = scalar_select %p1277, %s23, 1
      %s1279 = smul.addr %s1278, 2
      %s1280 = smul.addr %s1279, 4
      %s1281 = scalar_lea.vmem %s12, %s1280
      // Predicated region
      $region69: #{swin_block.1} parent=67 // pred_check
        %p1282 = pneg %p298
      $region70: #{swin_block.1} parent=67 // pred_check_branch
        %1284 = sbr.rel (%p1282) target = $region72
      $region71: #{swin_block.1} parent=67 // pred_region
        _
      $region72: #{swin_block.1} parent=67 // pred_fallthru
        _
    $region68: #{swin_block.1} parent=5 // pred_fallthru
      _
    %p1285 = scmp.le.s32.totalorder 2, %s18
    // Predicated region
    $region73: #{swin_block.1} parent=5 // pred_check
      %p1286 = pneg %p1285
    $region74: #{swin_block.1} parent=5 // pred_check_branch
      %1288 = sbr.rel (%p1286) target = $region76
    $region75: #{swin_block.1} parent=5 // pred_region
      %s1289 = ssub.s32 %s18, 2
      // Predicated region
      $region77: #{swin_block.1} parent=75 // pred_check
        %p1290 = pneg %p304
      $region78: #{swin_block.1} parent=75 // pred_check_branch
        %1292 = sbr.rel (%p1290) target = $region80
      $region79: #{swin_block.1} parent=75 // pred_region
        %p1293 = scmp.lt.s32.totalorder %s24, 1
        %s1294 = scalar_select %p1293, %s24, 1
        %s1295 = smul.addr %s1294, 2
        %s1296 = smul.addr %s1295, 4
        %s1297 = scalar_lea.vmem %s12, %s1296
      $region80: #{swin_block.1} parent=75 // pred_fallthru
        _
    $region76: #{swin_block.1} parent=5 // pred_fallthru
      _
  $region6: #{swin_block.1} parent=0 // loop_footer
    %s22 = sadd.s32 1, %s18
  $region7: #{swin_block.1} parent=0 // loop_footer_branch
    %17 = sbr.rel target = $region3
  $region8: #{swin_block.1} parent=0 // loop_exit
    _

</llo_original>
